<compile_context>
chip_gen: v5e
topology: v5e:2x2
jax: 0.10.0
libtpu: 0.0.40
codegen_flags: <defaults>
</compile_context>

<pallas_src>
import functools

import jax
import jax.numpy as jnp
from jax.experimental import pallas as pl
from jax.experimental.pallas import tpu as pltpu

LANE = 128
VMEM_LIMIT_BYTES = 48 * 1024 * 1024   # <= v7x's 64 MiB physical VMEM
FUSED_VMEM_BUDGET = 40 * 1024 * 1024  # headroom below VMEM_LIMIT_BYTES


def _round_up(v, m):
    return ((v + m - 1) // m) * m


# --------------------------------------------------------------------------
# Fully fused kernel: both GCN layers in one grid-less pallas_call.
# All operands are whole-array VMEM residents (tiny at this problem size).
# --------------------------------------------------------------------------
def _gcn_fused_kernel(a_ref, x_ref, w1_ref, b1_ref, w2_ref, b2_ref, o_ref, *,
                      num_classes):
    a = a_ref[...]                                                   # bf16

    # Layer 1: relu(A @ (X @ W1) + b1) -- bf16 MXU operands, f32 accumulation.
    xw = jnp.dot(x_ref[...], w1_ref[...], preferred_element_type=jnp.float32)
    h = jnp.dot(a, xw.astype(jnp.bfloat16),
                preferred_element_type=jnp.float32) + b1_ref[...]
    h = jnp.maximum(h, 0.0).astype(jnp.bfloat16)

    # Layer 2: log_softmax(A @ (H @ W2) + b2), masked to the real class lanes.
    hw = jnp.dot(h, w2_ref[...], preferred_element_type=jnp.float32)
    z = jnp.dot(a, hw.astype(jnp.bfloat16),
                preferred_element_type=jnp.float32) + b2_ref[...]

    lane = jax.lax.broadcasted_iota(jnp.int32, z.shape, 1)
    zm = jnp.where(lane < num_classes, z, -1e30)
    m = jnp.max(zm, axis=1, keepdims=True)
    s = zm - m
    lse = jnp.log(jnp.sum(jnp.exp(s), axis=1, keepdims=True))
    o_ref[...] = (s - lse).astype(o_ref.dtype)


def gcn_fused(a_bf, x_bf, w1_bf, b1, w2_bf, b2, *, num_classes):
    n_pad = a_bf.shape[0]
    c_pad = w2_bf.shape[1]
    kernel = functools.partial(_gcn_fused_kernel, num_classes=num_classes)
    # No grid / no BlockSpecs: each (already padded) array is brought whole
    # into VMEM; the single invocation does all four matmuls back to back.
    return pl.pallas_call(
        kernel,
        out_shape=jax.ShapeDtypeStruct((n_pad, c_pad), jnp.float32),
        compiler_params=pltpu.CompilerParams(
            vmem_limit_bytes=VMEM_LIMIT_BYTES,
        ),
    )(a_bf, x_bf, w1_bf, b1, w2_bf, b2)


# --------------------------------------------------------------------------
# Fallback for large graphs: one fused projection+aggregation kernel per layer,
# row-tiling A_hat over a "parallel" grid (megacore on v7x). X/W/bias stay
# resident; XW is recomputed per row tile (it is ~1 MFLOP) so each grid step
# is independent and megacore-safe.
# --------------------------------------------------------------------------
def _layer_kernel(a_ref, x_ref, w_ref, b_ref, o_ref, *, activation, num_valid):
    xw = jnp.dot(x_ref[...], w_ref[...],
                 preferred_element_type=jnp.float32).astype(jnp.bfloat16)
    z = jnp.dot(a_ref[...], xw, preferred_element_type=jnp.float32) + b_ref[...]
    if activation == "relu":
        o_ref[...] = jnp.maximum(z, 0.0).astype(o_ref.dtype)
    else:  # masked log_softmax over the first `num_valid` lanes (f32 epilogue)
        lane = jax.lax.broadcasted_iota(jnp.int32, z.shape, 1)
        zm = jnp.where(lane < num_valid, z, -1e30)
        m = jnp.max(zm, axis=1, keepdims=True)
        s = zm - m
        lse = jnp.log(jnp.sum(jnp.exp(s), axis=1, keepdims=True))
        o_ref[...] = (s - lse).astype(o_ref.dtype)


def gcn_layer(a_bf, x_bf, w_bf, b, *, activation, num_valid, tile_m, out_dtype):
    n_pad = a_bf.shape[0]
    f = x_bf.shape[1]
    p = w_bf.shape[1]
    kernel = functools.partial(
        _layer_kernel, activation=activation, num_valid=num_valid
    )
    # TODO(synk): for very large graphs add a contraction-axis ("arbitrary")
    # grid with an f32 accumulator so XW need not stay fully resident on v7x's
    # 64 MiB VMEM, and single-buffer the constant-index resident operands.
    return pl.pallas_call(
        kernel,
        out_shape=jax.ShapeDtypeStruct((n_pad, p), out_dtype),
        grid_spec=pltpu.PrefetchScalarGridSpec(
            num_scalar_prefetch=0,
            grid=(n_pad // tile_m,),
            in_specs=[
                pl.BlockSpec((tile_m, n_pad), lambda i: (i, 0)),  # A row tile
                pl.BlockSpec((n_pad, f), lambda i: (0, 0)),       # X resident
                pl.BlockSpec((f, p), lambda i: (0, 0)),           # W resident
                pl.BlockSpec((1, p), lambda i: (0, 0)),           # bias resident
            ],
            out_specs=pl.BlockSpec((tile_m, p), lambda i: (i, 0)),
        ),
        compiler_params=pltpu.CompilerParams(
            dimension_semantics=("parallel",),
            vmem_limit_bytes=VMEM_LIMIT_BYTES,
        ),
    )(a_bf, x_bf, w_bf, b)


# --------------------------------------------------------------------------
# Plain-JAX glue: dense normalized adjacency D^{-1/2} (A + I) D^{-1/2}
# --------------------------------------------------------------------------
def build_normalized_adjacency(edge_index, num_nodes):
    src, dst = edge_index[0], edge_index[1]
    a = jnp.zeros((num_nodes, num_nodes), dtype=jnp.float32)
    a = a.at[src, dst].set(1.0)
    a = a.at[dst, src].set(1.0)                      # undirected graph
    a = a + jnp.eye(num_nodes, dtype=jnp.float32)    # self-loops
    deg = jnp.sum(a, axis=1)
    dinv = jnp.where(deg > 0, 1.0 / jnp.sqrt(deg), 0.0)
    return dinv[:, None] * a * dinv[None, :]


# --------------------------------------------------------------------------
# Full forward: GCNConv -> ReLU -> GCNConv -> log_softmax
# --------------------------------------------------------------------------
def gcn_forward(x, edge_index, w1, b1, w2, b2, *, tile_m=256):
    n, f = x.shape
    h = w1.shape[1]
    c = w2.shape[1]

    a_hat = build_normalized_adjacency(edge_index, n)

    # Pad every dim to 128-lane multiples so all vreg/XLU/store paths are dense.
    n_pad = _round_up(n, LANE)
    f_pad = _round_up(f, LANE)
    h_pad = _round_up(h, LANE)
    c_pad = _round_up(c, LANE)

    a_p = jnp.zeros((n_pad, n_pad), jnp.float32).at[:n, :n].set(a_hat)
    x_p = jnp.zeros((n_pad, f_pad), jnp.float32).at[:n, :f].set(x)
    w1_p = jnp.zeros((f_pad, h_pad), jnp.float32).at[:f, :h].set(w1)
    w2_p = jnp.zeros((h_pad, c_pad), jnp.float32).at[:h, :c].set(w2)
    b1_p = jnp.zeros((1, h_pad), jnp.float32).at[0, :h].set(b1)
    b2_p = jnp.zeros((1, c_pad), jnp.float32).at[0, :c].set(b2)

    # bf16 MXU operands (halved HBM/VMEM traffic); f32 accumulation in-kernel.
    a_bf = a_p.astype(jnp.bfloat16)
    x_bf = x_p.astype(jnp.bfloat16)
    w1_bf = w1_p.astype(jnp.bfloat16)
    w2_bf = w2_p.astype(jnp.bfloat16)

    # Working-set estimate for the fully fused kernel (operands + output +
    # the two (n_pad, 128) f32 intermediates).
    fused_bytes = (
        a_bf.size * 2 + x_bf.size * 2 + w1_bf.size * 2 + w2_bf.size * 2
        + (b1_p.size + b2_p.size) * 4
        + n_pad * c_pad * 4
        + 2 * n_pad * h_pad * 4
    )

    if fused_bytes <= FUSED_VMEM_BUDGET:
        # Single kernel launch, everything resident: the right call at small N,
        # where launch/pipeline overhead dominates compute (<1 us of MXU work).
        out = gcn_fused(a_bf, x_bf, w1_bf, b1_p, w2_bf, b2_p, num_classes=c)
    else:
        # Large-graph fallback: two launches, A row-tiled across both
        # TensorCores ("parallel" grid); keep grid length a multiple of 2.
        tile = min(tile_m, n_pad)
        while n_pad % tile:
            tile //= 2
        h1 = gcn_layer(a_bf, x_bf, w1_bf, b1_p, activation="relu",
                       num_valid=h, tile_m=tile, out_dtype=jnp.bfloat16)
        out = gcn_layer(a_bf, h1, w2_bf, b2_p, activation="log_softmax",
                        num_valid=c, tile_m=tile, out_dtype=jnp.float32)

    return out[:n, :c]


if __name__ == "__main__":
    key = jax.random.PRNGKey(0)
    k_x, k_e, k_w1, k_b1, k_w2, k_b2 = jax.random.split(key, 6)

    # Small synthetic "Citeseer-like" shapes (hidden=16 as in the module).
    num_nodes = 256
    num_features = 64
    hidden = 16
    num_classes = 6
    num_edges = 512

    x = jax.random.normal(k_x, (num_nodes, num_features), dtype=jnp.float32)
    edge_index = jax.random.randint(
        k_e, (2, num_edges), 0, num_nodes, dtype=jnp.int32
    )
    w1 = jax.random.normal(k_w1, (num_features, hidden), dtype=jnp.float32) * 0.1
    b1 = jax.random.normal(k_b1, (hidden,), dtype=jnp.float32) * 0.01
    w2 = jax.random.normal(k_w2, (hidden, num_classes), dtype=jnp.float32) * 0.1
    b2 = jax.random.normal(k_b2, (num_classes,), dtype=jnp.float32) * 0.01

    out = gcn_forward(x, edge_index, w1, b1, w2, b2)
    out = jax.block_until_ready(out)
    assert out.shape == (num_nodes, num_classes)

    # Pure-JAX reference that mirrors the kernel's bf16 rounding points
    # (inputs + intermediates), with f32 accumulation.
    hi = jax.lax.Precision.HIGHEST
    bf = lambda t: t.astype(jnp.bfloat16).astype(jnp.float32)
    a_hat = build_normalized_adjacency(edge_index, num_nodes)
    xw_r = bf(jnp.dot(bf(x), bf(w1), precision=hi))
    h_r = bf(jnp.maximum(jnp.dot(bf(a_hat), xw_r, precision=hi) + b1[None, :], 0.0))
    hw_r = bf(jnp.dot(h_r, bf(w2), precision=hi))
    z_r = jnp.dot(bf(a_hat), hw_r, precision=hi) + b2[None, :]
    ref = jax.nn.log_softmax(z_r, axis=1)

    assert jnp.allclose(out, ref, atol=2e-3, rtol=2e-3), "mismatch vs reference"

    print("KERNEL_OK")
</pallas_src>

<mosaic_0001>
module attributes {stable_mosaic.version = 11 : i64} {
  func.func @_gcn_fused_kernel(%arg0: memref<256x256xbf16, #tpu.memory_space<vmem>>, %arg1: memref<256x128xbf16, #tpu.memory_space<vmem>>, %arg2: memref<128x128xbf16, #tpu.memory_space<vmem>>, %arg3: memref<1x128xf32, #tpu.memory_space<vmem>>, %arg4: memref<128x128xbf16, #tpu.memory_space<vmem>>, %arg5: memref<1x128xf32, #tpu.memory_space<vmem>>, %arg6: memref<256x128xf32, #tpu.memory_space<vmem>>) attributes {dimension_semantics = [], scalar_prefetch = 0 : i64, scratch_operands = 0 : i64, tpu.core_type = #tpu.core_type<tc>} {
    %c0 = arith.constant 0 : index
    %c0_0 = arith.constant 0 : index
    %0 = vector.load %arg0[%c0, %c0_0] : memref<256x256xbf16, #tpu.memory_space<vmem>>, vector<256x256xbf16>
    %c0_1 = arith.constant 0 : index
    %c0_2 = arith.constant 0 : index
    %1 = vector.load %arg1[%c0_1, %c0_2] : memref<256x128xbf16, #tpu.memory_space<vmem>>, vector<256x128xbf16>
    %c0_3 = arith.constant 0 : index
    %c0_4 = arith.constant 0 : index
    %2 = vector.load %arg2[%c0_3, %c0_4] : memref<128x128xbf16, #tpu.memory_space<vmem>>, vector<128x128xbf16>
    %cst = arith.constant dense<0.000000e+00> : vector<256x128xf32>
    %3 = tpu.matmul %1, %2, %cst {dimension_numbers = #tpu.dot_dimension_numbers<[1], [0], [0], [1], [0, 0, 1, 1], [], []>} : vector<256x128xbf16>, vector<128x128xbf16>, vector<256x128xf32> -> vector<256x128xf32>
    %4 = arith.truncf %3 : vector<256x128xf32> to vector<256x128xbf16>
    %cst_5 = arith.constant dense<0.000000e+00> : vector<256x128xf32>
    %5 = tpu.matmul %0, %4, %cst_5 {dimension_numbers = #tpu.dot_dimension_numbers<[1], [0], [0], [1], [0, 0, 1, 1], [], []>} : vector<256x256xbf16>, vector<256x128xbf16>, vector<256x128xf32> -> vector<256x128xf32>
    %c0_6 = arith.constant 0 : index
    %c0_7 = arith.constant 0 : index
    %6 = vector.load %arg3[%c0_6, %c0_7] : memref<1x128xf32, #tpu.memory_space<vmem>>, vector<1x128xf32>
    %7 = vector.broadcast %6 : vector<1x128xf32> to vector<256x128xf32>
    %8 = arith.addf %5, %7 : vector<256x128xf32>
    %cst_8 = arith.constant 0.000000e+00 : f32
    %9 = vector.broadcast %cst_8 : f32 to vector<256x128xf32>
    %10 = arith.maximumf %8, %9 : vector<256x128xf32>
    %11 = arith.truncf %10 : vector<256x128xf32> to vector<256x128xbf16>
    %c0_9 = arith.constant 0 : index
    %c0_10 = arith.constant 0 : index
    %12 = vector.load %arg4[%c0_9, %c0_10] : memref<128x128xbf16, #tpu.memory_space<vmem>>, vector<128x128xbf16>
    %cst_11 = arith.constant dense<0.000000e+00> : vector<256x128xf32>
    %13 = tpu.matmul %11, %12, %cst_11 {dimension_numbers = #tpu.dot_dimension_numbers<[1], [0], [0], [1], [0, 0, 1, 1], [], []>} : vector<256x128xbf16>, vector<128x128xbf16>, vector<256x128xf32> -> vector<256x128xf32>
    %14 = arith.truncf %13 : vector<256x128xf32> to vector<256x128xbf16>
    %cst_12 = arith.constant dense<0.000000e+00> : vector<256x128xf32>
    %15 = tpu.matmul %0, %14, %cst_12 {dimension_numbers = #tpu.dot_dimension_numbers<[1], [0], [0], [1], [0, 0, 1, 1], [], []>} : vector<256x256xbf16>, vector<256x128xbf16>, vector<256x128xf32> -> vector<256x128xf32>
    %c0_13 = arith.constant 0 : index
    %c0_14 = arith.constant 0 : index
    %16 = vector.load %arg5[%c0_13, %c0_14] : memref<1x128xf32, #tpu.memory_space<vmem>>, vector<1x128xf32>
    %17 = vector.broadcast %16 : vector<1x128xf32> to vector<256x128xf32>
    %18 = arith.addf %15, %17 : vector<256x128xf32>
    %19 = tpu.iota {dimensions = array<i32: 1>} : vector<256x128xi32>
    %c6_i32 = arith.constant 6 : i32
    %20 = vector.broadcast %c6_i32 : i32 to vector<256x128xi32>
    %21 = arith.cmpi slt, %19, %20 : vector<256x128xi32>
    %cst_15 = arith.constant -1.000000e+30 : f32
    %22 = vector.broadcast %cst_15 : f32 to vector<256x128xf32>
    %23 = arith.select %21, %18, %22 : vector<256x128xi1>, vector<256x128xf32>
    %cst_16 = arith.constant dense<0xFF800000> : vector<256xf32>
    %24 = vector.multi_reduction <maximumf>, %23, %cst_16 [1] : vector<256x128xf32> to vector<256xf32>
    %25 = vector.shape_cast %24 : vector<256xf32> to vector<256x1xf32>
    %26 = vector.broadcast %25 : vector<256x1xf32> to vector<256x128xf32>
    %27 = arith.subf %23, %26 : vector<256x128xf32>
    %28 = math.exp %27 : vector<256x128xf32>
    %cst_17 = arith.constant dense<0.000000e+00> : vector<256xf32>
    %29 = vector.multi_reduction <add>, %28, %cst_17 [1] : vector<256x128xf32> to vector<256xf32>
    %30 = vector.shape_cast %29 : vector<256xf32> to vector<256x1xf32>
    %31 = math.log %30 : vector<256x1xf32>
    %32 = vector.broadcast %31 : vector<256x1xf32> to vector<256x128xf32>
    %33 = arith.subf %27, %32 : vector<256x128xf32>
    %c0_18 = arith.constant 0 : index
    %c0_19 = arith.constant 0 : index
    %34 = vector.load %arg6[%c0_18, %c0_19] : memref<256x128xf32, #tpu.memory_space<vmem>>, vector<256x128xf32>
    tpu.vector_store %arg6[%c0_18, %c0_19], %33 {strides = array<i32>} : memref<256x128xf32, #tpu.memory_space<vmem>>, vector<256x128xf32>,
    return
  }
}

</mosaic_0001>

<llo_original>
// kernel: tpu_custom_call.1
$region0: #{tpu_custom_call.1}
  #allocation0 [shape = 'u32[]', space=smem, size = 0x4, offset = 0x4, fixed_abs, tag = 'smem constant byte address 0x4 - core index']
  #allocation1 [shape = 'u32[72,128]{1,0:T(1,128)}', space=vmem, size = 0x9000, scoped, tag = 'internal scratch']
  %s0 = inlined_call_operand.hbm [shape: bf16[256,256], index: 0, kind: input, shape index: {}]
  %s1 = inlined_call_operand.hbm [shape: bf16[256,128], index: 1, kind: input, shape index: {}]
  %s2 = inlined_call_operand.hbm [shape: bf16[128,128], index: 2, kind: input, shape index: {}]
  %s3 = inlined_call_operand.vmem [shape: f32[1,128], index: 3, kind: input, shape index: {}]
  %s4 = inlined_call_operand.hbm [shape: bf16[128,128], index: 4, kind: input, shape index: {}]
  %s5 = inlined_call_operand.vmem [shape: f32[1,128], index: 5, kind: input, shape index: {}]
  %s6 = inlined_call_operand.hbm [shape: f32[256,128], index: 6, kind: output, shape index: {}]
  %s7 = sld [smem:[#allocation0]]
  $region50: #{tpu_custom_call.1} parent=0
    _
  %s9 = ssub.s32 1, %s7
  %s10 = scalar_select 0, %s9, %s7
  $region1: #{tpu_custom_call.1} parent=0
    #allocation2 [shape = 'u8[131072]{0}', space=vmem, size = 0x20000, scoped, tag = 'input window, operand 0, single buffered']
    #allocation3 [shape = 's32[1]{0}', space=sflag, size = 0x4, scoped, tag = 'scoped memory for tpu_custom_call.1']
    #allocation4 [shape = 's32[1]{0}', space=sflag, size = 0x4, scoped, tag = 'scoped memory for tpu_custom_call.1']
    #allocation5 [shape = 'u8[65536]{0}', space=vmem, size = 0x10000, scoped, tag = 'input window, operand 1, single buffered']
    #allocation6 [shape = 's32[1]{0}', space=sflag, size = 0x4, scoped, tag = 'scoped memory for tpu_custom_call.1']
    #allocation7 [shape = 'u8[32768]{0}', space=vmem, size = 0x8000, scoped, tag = 'input window, operand 2, single buffered']
    #allocation8 [shape = 'u8[32768]{0}', space=vmem, size = 0x8000, scoped, tag = 'input window, operand 4, single buffered']
    #allocation9 [shape = 's32[1]{0}', space=sflag, size = 0x4, scoped, tag = 'scoped memory for tpu_custom_call.1']
    #allocation10 [shape = 'u8[131072]{0}', space=vmem, size = 0x20000, scoped, tag = 'output window, operand 0, single buffered']
    %11 = vsyncpa [#allocation3], 0
    %12 = vsyncpa [#allocation6], 0
    %13 = vsyncpa [#allocation9], 0
    %14 = vsyncpa [#allocation4], 0
    // Predicated region
    $region2: #{tpu_custom_call.1} parent=1 // pred_check
      _
    $region3: #{tpu_custom_call.1} parent=1 // pred_check_branch
      %16 = sbr.rel (0) target = $region5
    $region4: #{tpu_custom_call.1} parent=1 // pred_region
      %18 = vsyncadd [#allocation3], 0
      %s19 = sshll.u32 %s0, 4
      %s20 = int_to_ptr.hbm [resolvable:$true] %s19
      %s21 = sshll.u32 [#allocation2], 4
      %s22 = int_to_ptr.vmem [resolvable:$true] %s21
      %27 = dma.hbm_to_vmem [thread:$0]  %s20, 4096, %s22, [#allocation3], 128, 128, 8
    $region5: #{tpu_custom_call.1} parent=1 // pred_fallthru
      _
    // Predicated region
    $region6: #{tpu_custom_call.1} parent=1 // pred_check
      _
    $region7: #{tpu_custom_call.1} parent=1 // pred_check_branch
      %29 = sbr.rel (0) target = $region9
    $region8: #{tpu_custom_call.1} parent=1 // pred_region
      %31 = vsyncadd [#allocation6], 0
      %s32 = sshll.u32 %s1, 4
      %s33 = int_to_ptr.hbm [resolvable:$true] %s32
      %s34 = sshll.u32 [#allocation5], 4
      %s35 = int_to_ptr.vmem [resolvable:$true] %s34
      %40 = dma.hbm_to_vmem [thread:$0]  %s33, 2048, %s35, [#allocation6], 64, 64, 4
    $region9: #{tpu_custom_call.1} parent=1 // pred_fallthru
      _
    // Predicated region
    $region10: #{tpu_custom_call.1} parent=1 // pred_check
      _
    $region11: #{tpu_custom_call.1} parent=1 // pred_check_branch
      %42 = sbr.rel (0) target = $region13
    $region12: #{tpu_custom_call.1} parent=1 // pred_region
      %44 = vsyncadd [#allocation6], 0
      %s45 = sshll.u32 %s2, 4
      %s46 = int_to_ptr.hbm [resolvable:$true] %s45
      %s47 = sshll.u32 [#allocation7], 4
      %s48 = int_to_ptr.vmem [resolvable:$true] %s47
      %53 = dma.hbm_to_vmem [thread:$0]  %s46, 1024, %s48, [#allocation6], 64, 64, 4
    $region13: #{tpu_custom_call.1} parent=1 // pred_fallthru
      _
    // Predicated region
    $region14: #{tpu_custom_call.1} parent=1 // pred_check
      _
    $region15: #{tpu_custom_call.1} parent=1 // pred_check_branch
      %55 = sbr.rel (0) target = $region17
    $region16: #{tpu_custom_call.1} parent=1 // pred_region
      _
    $region17: #{tpu_custom_call.1} parent=1 // pred_fallthru
      _
    // Predicated region
    $region18: #{tpu_custom_call.1} parent=1 // pred_check
      _
    $region19: #{tpu_custom_call.1} parent=1 // pred_check_branch
      %57 = sbr.rel (0) target = $region21
    $region20: #{tpu_custom_call.1} parent=1 // pred_region
      %59 = vsyncadd [#allocation9], 0
      %s60 = sshll.u32 %s4, 4
      %s61 = int_to_ptr.hbm [resolvable:$true] %s60
      %s62 = sshll.u32 [#allocation8], 4
      %s63 = int_to_ptr.vmem [resolvable:$true] %s62
      %68 = dma.hbm_to_vmem [thread:$0]  %s61, 1024, %s63, [#allocation9], 64, 64, 4
    $region21: #{tpu_custom_call.1} parent=1 // pred_fallthru
      _
    // Predicated region
    $region22: #{tpu_custom_call.1} parent=1 // pred_check
      _
    $region23: #{tpu_custom_call.1} parent=1 // pred_check_branch
      %70 = sbr.rel (0) target = $region25
    $region24: #{tpu_custom_call.1} parent=1 // pred_region
      _
    $region25: #{tpu_custom_call.1} parent=1 // pred_fallthru
      _
    // Predicated region
    $region26: #{tpu_custom_call.1} parent=1 // pred_check
      _
    $region27: #{tpu_custom_call.1} parent=1 // pred_check_branch
      %72 = sbr.rel (0) target = $region29
    $region28: #{tpu_custom_call.1} parent=1 // pred_region
      %74 = dma.done [#allocation3], 4096
    $region29: #{tpu_custom_call.1} parent=1 // pred_fallthru
      _
    // Predicated region
    $region30: #{tpu_custom_call.1} parent=1 // pred_check
      _
    $region31: #{tpu_custom_call.1} parent=1 // pred_check_branch
      %76 = sbr.rel (0) target = $region33
    $region32: #{tpu_custom_call.1} parent=1 // pred_region
      %78 = dma.done [#allocation6], 2048
    $region33: #{tpu_custom_call.1} parent=1 // pred_fallthru
      _
    // Predicated region
    $region34: #{tpu_custom_call.1} parent=1 // pred_check
      _
    $region35: #{tpu_custom_call.1} parent=1 // pred_check_branch
      %80 = sbr.rel (0) target = $region37
    $region36: #{tpu_custom_call.1} parent=1 // pred_region
      %82 = dma.done [#allocation6], 1024
    $region37: #{tpu_custom_call.1} parent=1 // pred_fallthru
      _
    // Predicated region
    $region38: #{tpu_custom_call.1} parent=1 // pred_check
      _
    $region39: #{tpu_custom_call.1} parent=1 // pred_check_branch
      %84 = sbr.rel (0) target = $region41
    $region40: #{tpu_custom_call.1} parent=1 // pred_region
      %86 = dma.done [#allocation9], 1024
    $region41: #{tpu_custom_call.1} parent=1 // pred_fallthru
      _
    %v87 = vld [vmem:[#allocation2] sm:$0xff]
    %v88 = vld [vmem:[#allocation2 + $0x8] sm:$0xff]
    %v89 = vld [vmem:[#allocation2 + $0x10] sm:$0xff]
    %v90 = vld [vmem:[#allocation2 + $0x18] sm:$0xff]
    %v91 = vld [vmem:[#allocation2 + $0x20] sm:$0xff]
    %v92 = vld [vmem:[#allocation2 + $0x28] sm:$0xff]
    %v93 = vld [vmem:[#allocation2 + $0x30] sm:$0xff]
    %v94 = vld [vmem:[#allocation2 + $0x38] sm:$0xff]
    %v95 = vld [vmem:[#allocation2 + $0x40] sm:$0xff]
    %v96 = vld [vmem:[#allocation2 + $0x48] sm:$0xff]
    %v97 = vld [vmem:[#allocation2 + $0x50] sm:$0xff]
    %v98 = vld [vmem:[#allocation2 + $0x58] sm:$0xff]
    %v99 = vld [vmem:[#allocation2 + $0x60] sm:$0xff]
    %v100 = vld [vmem:[#allocation2 + $0x68] sm:$0xff]
    %v101 = vld [vmem:[#allocation2 + $0x70] sm:$0xff]
    %v102 = vld [vmem:[#allocation2 + $0x78] sm:$0xff]
    %v103 = vld [vmem:[#allocation2 + $0x80] sm:$0xff]
    %v104 = vld [vmem:[#allocation2 + $0x88] sm:$0xff]
    %v105 = vld [vmem:[#allocation2 + $0x90] sm:$0xff]
    %v106 = vld [vmem:[#allocation2 + $0x98] sm:$0xff]
    %v107 = vld [vmem:[#allocation2 + $0xa0] sm:$0xff]
    %v108 = vld [vmem:[#allocation2 + $0xa8] sm:$0xff]
    %v109 = vld [vmem:[#allocation2 + $0xb0] sm:$0xff]
    %v110 = vld [vmem:[#allocation2 + $0xb8] sm:$0xff]
    %v111 = vld [vmem:[#allocation2 + $0xc0] sm:$0xff]
    %v112 = vld [vmem:[#allocation2 + $0xc8] sm:$0xff]
    %v113 = vld [vmem:[#allocation2 + $0xd0] sm:$0xff]
    %v114 = vld [vmem:[#allocation2 + $0xd8] sm:$0xff]
    %v115 = vld [vmem:[#allocation2 + $0xe0] sm:$0xff]
    %v116 = vld [vmem:[#allocation2 + $0xe8] sm:$0xff]
    %v117 = vld [vmem:[#allocation2 + $0xf0] sm:$0xff]
    %v118 = vld [vmem:[#allocation2 + $0xf8] sm:$0xff]
    %v119 = vld [vmem:[#allocation5] sm:$0xf]
    %v120 = vld [vmem:[#allocation5 + $0x4] sm:$0xf]
    %v121 = vld [vmem:[#allocation5 + $0x8] sm:$0xf]
    %v122 = vld [vmem:[#allocation5 + $0xc] sm:$0xf]
    %v123 = vld [vmem:[#allocation5 + $0x10] sm:$0xf]
    %v124 = vld [vmem:[#allocation5 + $0x14] sm:$0xf]
    %v125 = vld [vmem:[#allocation5 + $0x18] sm:$0xf]
    %v126 = vld [vmem:[#allocation5 + $0x1c] sm:$0xf]
    %v127 = vld [vmem:[#allocation5 + $0x20] sm:$0xf]
    %v128 = vld [vmem:[#allocation5 + $0x24] sm:$0xf]
    %v129 = vld [vmem:[#allocation5 + $0x28] sm:$0xf]
    %v130 = vld [vmem:[#allocation5 + $0x2c] sm:$0xf]
    %v131 = vld [vmem:[#allocation5 + $0x30] sm:$0xf]
    %v132 = vld [vmem:[#allocation5 + $0x34] sm:$0xf]
    %v133 = vld [vmem:[#allocation5 + $0x38] sm:$0xf]
    %v134 = vld [vmem:[#allocation5 + $0x3c] sm:$0xf]
    %v135 = vld [vmem:[#allocation5 + $0x40] sm:$0xf]
    %v136 = vld [vmem:[#allocation5 + $0x44] sm:$0xf]
    %v137 = vld [vmem:[#allocation5 + $0x48] sm:$0xf]
    %v138 = vld [vmem:[#allocation5 + $0x4c] sm:$0xf]
    %v139 = vld [vmem:[#allocation5 + $0x50] sm:$0xf]
    %v140 = vld [vmem:[#allocation5 + $0x54] sm:$0xf]
    %v141 = vld [vmem:[#allocation5 + $0x58] sm:$0xf]
    %v142 = vld [vmem:[#allocation5 + $0x5c] sm:$0xf]
    %v143 = vld [vmem:[#allocation5 + $0x60] sm:$0xf]
    %v144 = vld [vmem:[#allocation5 + $0x64] sm:$0xf]
    %v145 = vld [vmem:[#allocation5 + $0x68] sm:$0xf]
    %v146 = vld [vmem:[#allocation5 + $0x6c] sm:$0xf]
    %v147 = vld [vmem:[#allocation5 + $0x70] sm:$0xf]
    %v148 = vld [vmem:[#allocation5 + $0x74] sm:$0xf]
    %v149 = vld [vmem:[#allocation5 + $0x78] sm:$0xf]
    %v150 = vld [vmem:[#allocation5 + $0x7c] sm:$0xf]
    %v151 = vld [vmem:[#allocation7] sm:$0xf]
    %v152 = vld [vmem:[#allocation7 + $0x4] sm:$0xf]
    %v153 = vld [vmem:[#allocation7 + $0x8] sm:$0xf]
    %v154 = vld [vmem:[#allocation7 + $0xc] sm:$0xf]
    %v155 = vld [vmem:[#allocation7 + $0x10] sm:$0xf]
    %v156 = vld [vmem:[#allocation7 + $0x14] sm:$0xf]
    %v157 = vld [vmem:[#allocation7 + $0x18] sm:$0xf]
    %v158 = vld [vmem:[#allocation7 + $0x1c] sm:$0xf]
    %v159 = vld [vmem:[#allocation7 + $0x20] sm:$0xf]
    %v160 = vld [vmem:[#allocation7 + $0x24] sm:$0xf]
    %v161 = vld [vmem:[#allocation7 + $0x28] sm:$0xf]
    %v162 = vld [vmem:[#allocation7 + $0x2c] sm:$0xf]
    %v163 = vld [vmem:[#allocation7 + $0x30] sm:$0xf]
    %v164 = vld [vmem:[#allocation7 + $0x34] sm:$0xf]
    %v165 = vld [vmem:[#allocation7 + $0x38] sm:$0xf]
    %v166 = vld [vmem:[#allocation7 + $0x3c] sm:$0xf]
    %v199 = vunpack.c.l.b16 %v119
    %v200 = vunpack.c.l.b16 %v120
    %v201 = vunpack.c.l.b16 %v121
    %v202 = vunpack.c.l.b16 %v122
    %v203 = vunpack.c.l.b16 %v123
    %v204 = vunpack.c.l.b16 %v124
    %v205 = vunpack.c.l.b16 %v125
    %v206 = vunpack.c.l.b16 %v126
    %v207 = vunpack.c.l.b16 %v127
    %v208 = vunpack.c.l.b16 %v128
    %v209 = vunpack.c.l.b16 %v129
    %v210 = vunpack.c.l.b16 %v130
    %v211 = vunpack.c.l.b16 %v131
    %v212 = vunpack.c.l.b16 %v132
    %v213 = vunpack.c.l.b16 %v133
    %v214 = vunpack.c.l.b16 %v134
    %v215 = vunpack.c.l.b16 %v135
    %v216 = vunpack.c.l.b16 %v136
    %v217 = vunpack.c.l.b16 %v137
    %v218 = vunpack.c.l.b16 %v138
    %v219 = vunpack.c.l.b16 %v139
    %v220 = vunpack.c.l.b16 %v140
    %v221 = vunpack.c.l.b16 %v141
    %v222 = vunpack.c.l.b16 %v142
    %v223 = vunpack.c.l.b16 %v143
    %v224 = vunpack.c.l.b16 %v144
    %v225 = vunpack.c.l.b16 %v145
    %v226 = vunpack.c.l.b16 %v146
    %v227 = vunpack.c.l.b16 %v147
    %v228 = vunpack.c.l.b16 %v148
    %v229 = vunpack.c.l.b16 %v149
    %v230 = vunpack.c.l.b16 %v150
    %v231 = vpack.c.b16 %v200, %v199
    %v232 = vpack.c.b16 %v202, %v201
    %v233 = vpack.c.b16 %v204, %v203
    %v234 = vpack.c.b16 %v206, %v205
    %v235 = vpack.c.b16 %v208, %v207
    %v236 = vpack.c.b16 %v210, %v209
    %v237 = vpack.c.b16 %v212, %v211
    %v238 = vpack.c.b16 %v214, %v213
    %v239 = vpack.c.b16 %v216, %v215
    %v240 = vpack.c.b16 %v218, %v217
    %v241 = vpack.c.b16 %v220, %v219
    %v242 = vpack.c.b16 %v222, %v221
    %v243 = vpack.c.b16 %v224, %v223
    %v244 = vpack.c.b16 %v226, %v225
    %v245 = vpack.c.b16 %v228, %v227
    %v246 = vpack.c.b16 %v230, %v229
    %v279 = vunpack.c.l.b16 %v151
    %v280 = vunpack.c.l.b16 %v152
    %v281 = vunpack.c.l.b16 %v153
    %v282 = vunpack.c.l.b16 %v154
    %v283 = vunpack.c.l.b16 %v155
    %v284 = vunpack.c.l.b16 %v156
    %v285 = vunpack.c.l.b16 %v157
    %v286 = vunpack.c.l.b16 %v158
    %v287 = vunpack.c.l.b16 %v159
    %v288 = vunpack.c.l.b16 %v160
    %v289 = vunpack.c.l.b16 %v161
    %v290 = vunpack.c.l.b16 %v162
    %v291 = vunpack.c.l.b16 %v163
    %v292 = vunpack.c.l.b16 %v164
    %v293 = vunpack.c.l.b16 %v165
    %v294 = vunpack.c.l.b16 %v166
    %v295 = vpack.c.b16 %v280, %v279
    %v296 = vpack.c.b16 %v282, %v281
    %v297 = vpack.c.b16 %v284, %v283
    %v298 = vpack.c.b16 %v286, %v285
    %v299 = vpack.c.b16 %v288, %v287
    %v300 = vpack.c.b16 %v290, %v289
    %v301 = vpack.c.b16 %v292, %v291
    %v302 = vpack.c.b16 %v294, %v293
    %311 = vmatpush.bf16.msra.mxu0 %v302
    %312 = vmatpush.bf16.msra.mxu0 %v301
    %313 = vmatpush.bf16.msra.mxu0 %v300
    %314 = vmatpush.bf16.msra.mxu0 %v299
    %315 = vmatpush.bf16.msra.mxu0 %v298
    %316 = vmatpush.bf16.msra.mxu0 %v297
    %317 = vmatpush.bf16.msra.mxu0 %v296
    %318 = vmatpush.bf16.msra.mxu0 %v295
    %319 = vmatmul.bf16.gmra.mxu0 %v231
    %v320 = vpop.f32.mrf.mxu0
    %v321 = vadd.f32 0.0, %v320
    %v322 = vpop.f32.mrf.mxu0
    %v323 = vadd.f32 0.0, %v322
    %324 = vmatmul.bf16.gmra.mxu0 %v232
    %v325 = vpop.f32.mrf.mxu0
    %v326 = vadd.f32 0.0, %v325
    %v327 = vpop.f32.mrf.mxu0
    %v328 = vadd.f32 0.0, %v327
    %329 = vmatmul.bf16.gmra.mxu0 %v233
    %v330 = vpop.f32.mrf.mxu0
    %v331 = vadd.f32 0.0, %v330
    %v332 = vpop.f32.mrf.mxu0
    %v333 = vadd.f32 0.0, %v332
    %334 = vmatmul.bf16.gmra.mxu0 %v234
    %v335 = vpop.f32.mrf.mxu0
    %v336 = vadd.f32 0.0, %v335
    %v337 = vpop.f32.mrf.mxu0
    %v338 = vadd.f32 0.0, %v337
    %339 = vmatmul.bf16.gmra.mxu0 %v235
    %v340 = vpop.f32.mrf.mxu0
    %v341 = vadd.f32 0.0, %v340
    %v342 = vpop.f32.mrf.mxu0
    %v343 = vadd.f32 0.0, %v342
    %344 = vmatmul.bf16.gmra.mxu0 %v236
    %v345 = vpop.f32.mrf.mxu0
    %v346 = vadd.f32 0.0, %v345
    %v347 = vpop.f32.mrf.mxu0
    %v348 = vadd.f32 0.0, %v347
    %349 = vmatmul.bf16.gmra.mxu0 %v237
    %v350 = vpop.f32.mrf.mxu0
    %v351 = vadd.f32 0.0, %v350
    %v352 = vpop.f32.mrf.mxu0
    %v353 = vadd.f32 0.0, %v352
    %354 = vmatmul.bf16.gmra.mxu0 %v238
    %v355 = vpop.f32.mrf.mxu0
    %v356 = vadd.f32 0.0, %v355
    %v357 = vpop.f32.mrf.mxu0
    %v358 = vadd.f32 0.0, %v357
    %359 = vmatmul.bf16.gmra.mxu0 %v239
    %v360 = vpop.f32.mrf.mxu0
    %v361 = vadd.f32 0.0, %v360
    %v362 = vpop.f32.mrf.mxu0
    %v363 = vadd.f32 0.0, %v362
    %364 = vmatmul.bf16.gmra.mxu0 %v240
    %v365 = vpop.f32.mrf.mxu0
    %v366 = vadd.f32 0.0, %v365
    %v367 = vpop.f32.mrf.mxu0
    %v368 = vadd.f32 0.0, %v367
    %369 = vmatmul.bf16.gmra.mxu0 %v241
    %v370 = vpop.f32.mrf.mxu0
    %v371 = vadd.f32 0.0, %v370
    %v372 = vpop.f32.mrf.mxu0
    %v373 = vadd.f32 0.0, %v372
    %374 = vmatmul.bf16.gmra.mxu0 %v242
    %v375 = vpop.f32.mrf.mxu0
    %v376 = vadd.f32 0.0, %v375
    %v377 = vpop.f32.mrf.mxu0
    %v378 = vadd.f32 0.0, %v377
    %379 = vmatmul.bf16.gmra.mxu0 %v243
    %v380 = vpop.f32.mrf.mxu0
    %v381 = vadd.f32 0.0, %v380
    %v382 = vpop.f32.mrf.mxu0
    %v383 = vadd.f32 0.0, %v382
    %384 = vmatmul.bf16.gmra.mxu0 %v244
    %v385 = vpop.f32.mrf.mxu0
    %v386 = vadd.f32 0.0, %v385
    %v387 = vpop.f32.mrf.mxu0
    %v388 = vadd.f32 0.0, %v387
    %389 = vmatmul.bf16.gmra.mxu0 %v245
    %v390 = vpop.f32.mrf.mxu0
    %v391 = vadd.f32 0.0, %v390
    %v392 = vpop.f32.mrf.mxu0
    %v393 = vadd.f32 0.0, %v392
    %394 = vmatmul.bf16.gmra.mxu0 %v246
    %v395 = vpop.f32.mrf.mxu0
    %v396 = vadd.f32 0.0, %v395
    %v397 = vpop.f32.mrf.mxu0
    %v398 = vadd.f32 0.0, %v397
    %399 = vdwg.mxu0
    %v400 = vpack.c.bf16 %v323, %v321
    %v401 = vpack.c.bf16 %v328, %v326
    %v402 = vpack.c.bf16 %v333, %v331
    %v403 = vpack.c.bf16 %v338, %v336
    %v404 = vpack.c.bf16 %v343, %v341
    %v405 = vpack.c.bf16 %v348, %v346
    %v406 = vpack.c.bf16 %v353, %v351
    %v407 = vpack.c.bf16 %v358, %v356
    %v408 = vpack.c.bf16 %v363, %v361
    %v409 = vpack.c.bf16 %v368, %v366
    %v410 = vpack.c.bf16 %v373, %v371
    %v411 = vpack.c.bf16 %v378, %v376
    %v412 = vpack.c.bf16 %v383, %v381
    %v413 = vpack.c.bf16 %v388, %v386
    %v414 = vpack.c.bf16 %v393, %v391
    %v415 = vpack.c.bf16 %v398, %v396
    %v416 = vld [vmem:[%s3] sm:$0x1]
    %v418 = vperm.slane %v416, 0
    %v452 = vunpack.c.l.b16 %v87
    %v453 = vunpack.c.h.b16 %v87
    %v454 = vunpack.c.l.b16 %v88
    %v455 = vunpack.c.h.b16 %v88
    %v456 = vunpack.c.l.b16 %v89
    %v457 = vunpack.c.h.b16 %v89
    %v458 = vunpack.c.l.b16 %v90
    %v459 = vunpack.c.h.b16 %v90
    %v460 = vunpack.c.l.b16 %v91
    %v461 = vunpack.c.h.b16 %v91
    %v462 = vunpack.c.l.b16 %v92
    %v463 = vunpack.c.h.b16 %v92
    %v464 = vunpack.c.l.b16 %v93
    %v465 = vunpack.c.h.b16 %v93
    %v466 = vunpack.c.l.b16 %v94
    %v467 = vunpack.c.h.b16 %v94
    %v468 = vunpack.c.l.b16 %v95
    %v469 = vunpack.c.h.b16 %v95
    %v470 = vunpack.c.l.b16 %v96
    %v471 = vunpack.c.h.b16 %v96
    %v472 = vunpack.c.l.b16 %v97
    %v473 = vunpack.c.h.b16 %v97
    %v474 = vunpack.c.l.b16 %v98
    %v475 = vunpack.c.h.b16 %v98
    %v476 = vunpack.c.l.b16 %v99
    %v477 = vunpack.c.h.b16 %v99
    %v478 = vunpack.c.l.b16 %v100
    %v479 = vunpack.c.h.b16 %v100
    %v480 = vunpack.c.l.b16 %v101
    %v481 = vunpack.c.h.b16 %v101
    %v482 = vunpack.c.l.b16 %v102
    %v483 = vunpack.c.h.b16 %v102
    %v484 = vunpack.c.l.b16 %v103
    %v485 = vunpack.c.h.b16 %v103
    %v486 = vunpack.c.l.b16 %v104
    %v487 = vunpack.c.h.b16 %v104
    %v488 = vunpack.c.l.b16 %v105
    %v489 = vunpack.c.h.b16 %v105
    %v490 = vunpack.c.l.b16 %v106
    %v491 = vunpack.c.h.b16 %v106
    %v492 = vunpack.c.l.b16 %v107
    %v493 = vunpack.c.h.b16 %v107
    %v494 = vunpack.c.l.b16 %v108
    %v495 = vunpack.c.h.b16 %v108
    %v496 = vunpack.c.l.b16 %v109
    %v497 = vunpack.c.h.b16 %v109
    %v498 = vunpack.c.l.b16 %v110
    %v499 = vunpack.c.h.b16 %v110
    %v500 = vunpack.c.l.b16 %v111
    %v501 = vunpack.c.h.b16 %v111
    %v502 = vunpack.c.l.b16 %v112
    %v503 = vunpack.c.h.b16 %v112
    %v504 = vunpack.c.l.b16 %v113
    %v505 = vunpack.c.h.b16 %v113
    %v506 = vunpack.c.l.b16 %v114
    %v507 = vunpack.c.h.b16 %v114
    %v508 = vunpack.c.l.b16 %v115
    %v509 = vunpack.c.h.b16 %v115
    %v510 = vunpack.c.l.b16 %v116
    %v511 = vunpack.c.h.b16 %v116
    %v512 = vunpack.c.l.b16 %v117
    %v513 = vunpack.c.h.b16 %v117
    %v514 = vunpack.c.l.b16 %v118
    %v515 = vunpack.c.h.b16 %v118
    %v516 = vpack.c.b16 %v454, %v452
    %v517 = vpack.c.b16 %v455, %v453
    %v518 = vpack.c.b16 %v458, %v456
    %v519 = vpack.c.b16 %v459, %v457
    %v520 = vpack.c.b16 %v462, %v460
    %v521 = vpack.c.b16 %v463, %v461
    %v522 = vpack.c.b16 %v466, %v464
    %v523 = vpack.c.b16 %v467, %v465
    %v524 = vpack.c.b16 %v470, %v468
    %v525 = vpack.c.b16 %v471, %v469
    %v526 = vpack.c.b16 %v474, %v472
    %v527 = vpack.c.b16 %v475, %v473
    %v528 = vpack.c.b16 %v478, %v476
    %v529 = vpack.c.b16 %v479, %v477
    %v530 = vpack.c.b16 %v482, %v480
    %v531 = vpack.c.b16 %v483, %v481
    %v532 = vpack.c.b16 %v486, %v484
    %v533 = vpack.c.b16 %v487, %v485
    %v534 = vpack.c.b16 %v490, %v488
    %v535 = vpack.c.b16 %v491, %v489
    %v536 = vpack.c.b16 %v494, %v492
    %v537 = vpack.c.b16 %v495, %v493
    %v538 = vpack.c.b16 %v498, %v496
    %v539 = vpack.c.b16 %v499, %v497
    %v540 = vpack.c.b16 %v502, %v500
    %v541 = vpack.c.b16 %v503, %v501
    %v542 = vpack.c.b16 %v506, %v504
    %v543 = vpack.c.b16 %v507, %v505
    %v544 = vpack.c.b16 %v510, %v508
    %v545 = vpack.c.b16 %v511, %v509
    %v546 = vpack.c.b16 %v514, %v512
    %v547 = vpack.c.b16 %v515, %v513
    %580 = vmatpush.bf16.msra.mxu0 %v407
    %581 = vmatpush.bf16.msra.mxu0 %v406
    %582 = vmatpush.bf16.msra.mxu0 %v405
    %583 = vmatpush.bf16.msra.mxu0 %v404
    %584 = vmatpush.bf16.msra.mxu0 %v403
    %585 = vmatpush.bf16.msra.mxu0 %v402
    %586 = vmatpush.bf16.msra.mxu0 %v401
    %587 = vmatpush.bf16.msra.mxu0 %v400
    %588 = vmatmul.bf16.gmra.mxu0 %v516
    %v589 = vpop.f32.mrf.mxu0
    %v590 = vadd.f32 %v418, %v589
    %v591 = vpop.f32.mrf.mxu0
    %v592 = vadd.f32 %v418, %v591
    %593 = vmatmul.bf16.gmra.mxu0 %v518
    %v594 = vpop.f32.mrf.mxu0
    %v595 = vadd.f32 %v418, %v594
    %v596 = vpop.f32.mrf.mxu0
    %v597 = vadd.f32 %v418, %v596
    %598 = vmatmul.bf16.gmra.mxu0 %v520
    %v599 = vpop.f32.mrf.mxu0
    %v600 = vadd.f32 %v418, %v599
    %v601 = vpop.f32.mrf.mxu0
    %v602 = vadd.f32 %v418, %v601
    %603 = vmatmul.bf16.gmra.mxu0 %v522
    %v604 = vpop.f32.mrf.mxu0
    %v605 = vadd.f32 %v418, %v604
    %v606 = vpop.f32.mrf.mxu0
    %v607 = vadd.f32 %v418, %v606
    %608 = vmatmul.bf16.gmra.mxu0 %v524
    %v609 = vpop.f32.mrf.mxu0
    %v610 = vadd.f32 %v418, %v609
    %v611 = vpop.f32.mrf.mxu0
    %v612 = vadd.f32 %v418, %v611
    %613 = vmatmul.bf16.gmra.mxu0 %v526
    %v614 = vpop.f32.mrf.mxu0
    %v615 = vadd.f32 %v418, %v614
    %v616 = vpop.f32.mrf.mxu0
    %v617 = vadd.f32 %v418, %v616
    %618 = vmatmul.bf16.gmra.mxu0 %v528
    %v619 = vpop.f32.mrf.mxu0
    %v620 = vadd.f32 %v418, %v619
    %v621 = vpop.f32.mrf.mxu0
    %v622 = vadd.f32 %v418, %v621
    %623 = vmatmul.bf16.gmra.mxu0 %v530
    %v624 = vpop.f32.mrf.mxu0
    %v625 = vadd.f32 %v418, %v624
    %v626 = vpop.f32.mrf.mxu0
    %v627 = vadd.f32 %v418, %v626
    %628 = vmatmul.bf16.gmra.mxu0 %v532
    %v629 = vpop.f32.mrf.mxu0
    %v630 = vadd.f32 %v418, %v629
    %v631 = vpop.f32.mrf.mxu0
    %v632 = vadd.f32 %v418, %v631
    %633 = vmatmul.bf16.gmra.mxu0 %v534
    %v634 = vpop.f32.mrf.mxu0
    %v635 = vadd.f32 %v418, %v634
    %v636 = vpop.f32.mrf.mxu0
    %v637 = vadd.f32 %v418, %v636
    %638 = vmatmul.bf16.gmra.mxu0 %v536
    %v639 = vpop.f32.mrf.mxu0
    %v640 = vadd.f32 %v418, %v639
    %v641 = vpop.f32.mrf.mxu0
    %v642 = vadd.f32 %v418, %v641
    %643 = vmatmul.bf16.gmra.mxu0 %v538
    %v644 = vpop.f32.mrf.mxu0
    %v645 = vadd.f32 %v418, %v644
    %v646 = vpop.f32.mrf.mxu0
    %v647 = vadd.f32 %v418, %v646
    %648 = vmatmul.bf16.gmra.mxu0 %v540
    %v649 = vpop.f32.mrf.mxu0
    %v650 = vadd.f32 %v418, %v649
    %v651 = vpop.f32.mrf.mxu0
    %v652 = vadd.f32 %v418, %v651
    %653 = vmatmul.bf16.gmra.mxu0 %v542
    %v654 = vpop.f32.mrf.mxu0
    %v655 = vadd.f32 %v418, %v654
    %v656 = vpop.f32.mrf.mxu0
    %v657 = vadd.f32 %v418, %v656
    %658 = vmatmul.bf16.gmra.mxu0 %v544
    %v659 = vpop.f32.mrf.mxu0
    %v660 = vadd.f32 %v418, %v659
    %v661 = vpop.f32.mrf.mxu0
    %v662 = vadd.f32 %v418, %v661
    %663 = vmatmul.bf16.gmra.mxu0 %v546
    %v664 = vpop.f32.mrf.mxu0
    %v665 = vadd.f32 %v418, %v664
    %v666 = vpop.f32.mrf.mxu0
    %v667 = vadd.f32 %v418, %v666
    %668 = vdwg.mxu0
    %669 = vmatpush.bf16.msra.mxu0 %v415
    %670 = vmatpush.bf16.msra.mxu0 %v414
    %671 = vmatpush.bf16.msra.mxu0 %v413
    %672 = vmatpush.bf16.msra.mxu0 %v412
    %673 = vmatpush.bf16.msra.mxu0 %v411
    %674 = vmatpush.bf16.msra.mxu0 %v410
    %675 = vmatpush.bf16.msra.mxu0 %v409
    %676 = vmatpush.bf16.msra.mxu0 %v408
    %677 = vmatmul.bf16.gmra.mxu0 %v517
    %v678 = vpop.f32.mrf.mxu0
    %v679 = vadd.f32 %v590, %v678
    %v680 = vpop.f32.mrf.mxu0
    %v681 = vadd.f32 %v592, %v680
    %682 = vmatmul.bf16.gmra.mxu0 %v519
    %v683 = vpop.f32.mrf.mxu0
    %v684 = vadd.f32 %v595, %v683
    %v685 = vpop.f32.mrf.mxu0
    %v686 = vadd.f32 %v597, %v685
    %687 = vmatmul.bf16.gmra.mxu0 %v521
    %v688 = vpop.f32.mrf.mxu0
    %v689 = vadd.f32 %v600, %v688
    %v690 = vpop.f32.mrf.mxu0
    %v691 = vadd.f32 %v602, %v690
    %692 = vmatmul.bf16.gmra.mxu0 %v523
    %v693 = vpop.f32.mrf.mxu0
    %v694 = vadd.f32 %v605, %v693
    %v695 = vpop.f32.mrf.mxu0
    %v696 = vadd.f32 %v607, %v695
    %697 = vmatmul.bf16.gmra.mxu0 %v525
    %v698 = vpop.f32.mrf.mxu0
    %v699 = vadd.f32 %v610, %v698
    %v700 = vpop.f32.mrf.mxu0
    %v701 = vadd.f32 %v612, %v700
    %702 = vmatmul.bf16.gmra.mxu0 %v527
    %v703 = vpop.f32.mrf.mxu0
    %v704 = vadd.f32 %v615, %v703
    %v705 = vpop.f32.mrf.mxu0
    %v706 = vadd.f32 %v617, %v705
    %707 = vmatmul.bf16.gmra.mxu0 %v529
    %v708 = vpop.f32.mrf.mxu0
    %v709 = vadd.f32 %v620, %v708
    %v710 = vpop.f32.mrf.mxu0
    %v711 = vadd.f32 %v622, %v710
    %712 = vmatmul.bf16.gmra.mxu0 %v531
    %v713 = vpop.f32.mrf.mxu0
    %v714 = vadd.f32 %v625, %v713
    %v715 = vpop.f32.mrf.mxu0
    %v716 = vadd.f32 %v627, %v715
    %717 = vmatmul.bf16.gmra.mxu0 %v533
    %v718 = vpop.f32.mrf.mxu0
    %v719 = vadd.f32 %v630, %v718
    %v720 = vpop.f32.mrf.mxu0
    %v721 = vadd.f32 %v632, %v720
    %722 = vmatmul.bf16.gmra.mxu0 %v535
    %v723 = vpop.f32.mrf.mxu0
    %v724 = vadd.f32 %v635, %v723
    %v725 = vpop.f32.mrf.mxu0
    %v726 = vadd.f32 %v637, %v725
    %727 = vmatmul.bf16.gmra.mxu0 %v537
    %v728 = vpop.f32.mrf.mxu0
    %v729 = vadd.f32 %v640, %v728
    %v730 = vpop.f32.mrf.mxu0
    %v731 = vadd.f32 %v642, %v730
    %732 = vmatmul.bf16.gmra.mxu0 %v539
    %v733 = vpop.f32.mrf.mxu0
    %v734 = vadd.f32 %v645, %v733
    %v735 = vpop.f32.mrf.mxu0
    %v736 = vadd.f32 %v647, %v735
    %737 = vmatmul.bf16.gmra.mxu0 %v541
    %v738 = vpop.f32.mrf.mxu0
    %v739 = vadd.f32 %v650, %v738
    %v740 = vpop.f32.mrf.mxu0
    %v741 = vadd.f32 %v652, %v740
    %742 = vmatmul.bf16.gmra.mxu0 %v543
    %v743 = vpop.f32.mrf.mxu0
    %v744 = vadd.f32 %v655, %v743
    %v745 = vpop.f32.mrf.mxu0
    %v746 = vadd.f32 %v657, %v745
    %747 = vmatmul.bf16.gmra.mxu0 %v545
    %v748 = vpop.f32.mrf.mxu0
    %v749 = vadd.f32 %v660, %v748
    %v750 = vpop.f32.mrf.mxu0
    %v751 = vadd.f32 %v662, %v750
    %752 = vmatmul.bf16.gmra.mxu0 %v547
    %v753 = vpop.f32.mrf.mxu0
    %v754 = vadd.f32 %v665, %v753
    %v755 = vpop.f32.mrf.mxu0
    %v756 = vadd.f32 %v667, %v755
    %757 = vdwg.mxu0
    %v758 = vmax.f32 %v679, 0.0
    %v759 = vmax.f32 %v681, 0.0
    %v760 = vmax.f32 %v684, 0.0
    %v761 = vmax.f32 %v686, 0.0
    %v762 = vmax.f32 %v689, 0.0
    %v763 = vmax.f32 %v691, 0.0
    %v764 = vmax.f32 %v694, 0.0
    %v765 = vmax.f32 %v696, 0.0
    %v766 = vmax.f32 %v699, 0.0
    %v767 = vmax.f32 %v701, 0.0
    %v768 = vmax.f32 %v704, 0.0
    %v769 = vmax.f32 %v706, 0.0
    %v770 = vmax.f32 %v709, 0.0
    %v771 = vmax.f32 %v711, 0.0
    %v772 = vmax.f32 %v714, 0.0
    %v773 = vmax.f32 %v716, 0.0
    %v774 = vmax.f32 %v719, 0.0
    %v775 = vmax.f32 %v721, 0.0
    %v776 = vmax.f32 %v724, 0.0
    %v777 = vmax.f32 %v726, 0.0
    %v778 = vmax.f32 %v729, 0.0
    %v779 = vmax.f32 %v731, 0.0
    %v780 = vmax.f32 %v734, 0.0
    %v781 = vmax.f32 %v736, 0.0
    %v782 = vmax.f32 %v739, 0.0
    %v783 = vmax.f32 %v741, 0.0
    %v784 = vmax.f32 %v744, 0.0
    %v785 = vmax.f32 %v746, 0.0
    %v786 = vmax.f32 %v749, 0.0
    %v787 = vmax.f32 %v751, 0.0
    %v788 = vmax.f32 %v754, 0.0
    %v789 = vmax.f32 %v756, 0.0
    %v790 = vpack.c.bf16 %v759, %v758
    %v791 = vpack.c.bf16 %v761, %v760
    %v792 = vpack.c.bf16 %v763, %v762
    %v793 = vpack.c.bf16 %v765, %v764
    %v794 = vpack.c.bf16 %v767, %v766
    %v795 = vpack.c.bf16 %v769, %v768
    %v796 = vpack.c.bf16 %v771, %v770
    %v797 = vpack.c.bf16 %v773, %v772
    %v798 = vpack.c.bf16 %v775, %v774
    %v799 = vpack.c.bf16 %v777, %v776
    %v800 = vpack.c.bf16 %v779, %v778
    %v801 = vpack.c.bf16 %v781, %v780
    %v802 = vpack.c.bf16 %v783, %v782
    %v803 = vpack.c.bf16 %v785, %v784
    %v804 = vpack.c.bf16 %v787, %v786
    %v805 = vpack.c.bf16 %v789, %v788
    %v806 = vld [vmem:[#allocation8] sm:$0xf]
    %v807 = vld [vmem:[#allocation8 + $0x4] sm:$0xf]
    %v808 = vld [vmem:[#allocation8 + $0x8] sm:$0xf]
    %v809 = vld [vmem:[#allocation8 + $0xc] sm:$0xf]
    %v810 = vld [vmem:[#allocation8 + $0x10] sm:$0xf]
    %v811 = vld [vmem:[#allocation8 + $0x14] sm:$0xf]
    %v812 = vld [vmem:[#allocation8 + $0x18] sm:$0xf]
    %v813 = vld [vmem:[#allocation8 + $0x1c] sm:$0xf]
    %v814 = vld [vmem:[#allocation8 + $0x20] sm:$0xf]
    %v815 = vld [vmem:[#allocation8 + $0x24] sm:$0xf]
    %v816 = vld [vmem:[#allocation8 + $0x28] sm:$0xf]
    %v817 = vld [vmem:[#allocation8 + $0x2c] sm:$0xf]
    %v818 = vld [vmem:[#allocation8 + $0x30] sm:$0xf]
    %v819 = vld [vmem:[#allocation8 + $0x34] sm:$0xf]
    %v820 = vld [vmem:[#allocation8 + $0x38] sm:$0xf]
    %v821 = vld [vmem:[#allocation8 + $0x3c] sm:$0xf]
    %v838 = vunpack.c.l.b16 %v806
    %v839 = vunpack.c.l.b16 %v807
    %v840 = vunpack.c.l.b16 %v808
    %v841 = vunpack.c.l.b16 %v809
    %v842 = vunpack.c.l.b16 %v810
    %v843 = vunpack.c.l.b16 %v811
    %v844 = vunpack.c.l.b16 %v812
    %v845 = vunpack.c.l.b16 %v813
    %v846 = vunpack.c.l.b16 %v814
    %v847 = vunpack.c.l.b16 %v815
    %v848 = vunpack.c.l.b16 %v816
    %v849 = vunpack.c.l.b16 %v817
    %v850 = vunpack.c.l.b16 %v818
    %v851 = vunpack.c.l.b16 %v819
    %v852 = vunpack.c.l.b16 %v820
    %v853 = vunpack.c.l.b16 %v821
    %v854 = vpack.c.b16 %v839, %v838
    %v855 = vpack.c.b16 %v841, %v840
    %v856 = vpack.c.b16 %v843, %v842
    %v857 = vpack.c.b16 %v845, %v844
    %v858 = vpack.c.b16 %v847, %v846
    %v859 = vpack.c.b16 %v849, %v848
    %v860 = vpack.c.b16 %v851, %v850
    %v861 = vpack.c.b16 %v853, %v852
    %870 = vmatpush.bf16.msra.mxu0 %v861
    %871 = vmatpush.bf16.msra.mxu0 %v860
    %872 = vmatpush.bf16.msra.mxu0 %v859
    %873 = vmatpush.bf16.msra.mxu0 %v858
    %874 = vmatpush.bf16.msra.mxu0 %v857
    %875 = vmatpush.bf16.msra.mxu0 %v856
    %876 = vmatpush.bf16.msra.mxu0 %v855
    %877 = vmatpush.bf16.msra.mxu0 %v854
    %878 = vmatmul.bf16.gmra.mxu0 %v790
    %v879 = vpop.f32.mrf.mxu0
    %v880 = vadd.f32 0.0, %v879
    %v881 = vpop.f32.mrf.mxu0
    %v882 = vadd.f32 0.0, %v881
    %883 = vmatmul.bf16.gmra.mxu0 %v791
    %v884 = vpop.f32.mrf.mxu0
    %v885 = vadd.f32 0.0, %v884
    %v886 = vpop.f32.mrf.mxu0
    %v887 = vadd.f32 0.0, %v886
    %888 = vmatmul.bf16.gmra.mxu0 %v792
    %v889 = vpop.f32.mrf.mxu0
    %v890 = vadd.f32 0.0, %v889
    %v891 = vpop.f32.mrf.mxu0
    %v892 = vadd.f32 0.0, %v891
    %893 = vmatmul.bf16.gmra.mxu0 %v793
    %v894 = vpop.f32.mrf.mxu0
    %v895 = vadd.f32 0.0, %v894
    %v896 = vpop.f32.mrf.mxu0
    %v897 = vadd.f32 0.0, %v896
    %898 = vmatmul.bf16.gmra.mxu0 %v794
    %v899 = vpop.f32.mrf.mxu0
    %v900 = vadd.f32 0.0, %v899
    %v901 = vpop.f32.mrf.mxu0
    %v902 = vadd.f32 0.0, %v901
    %903 = vmatmul.bf16.gmra.mxu0 %v795
    %v904 = vpop.f32.mrf.mxu0
    %v905 = vadd.f32 0.0, %v904
    %v906 = vpop.f32.mrf.mxu0
    %v907 = vadd.f32 0.0, %v906
    %908 = vmatmul.bf16.gmra.mxu0 %v796
    %v909 = vpop.f32.mrf.mxu0
    %v910 = vadd.f32 0.0, %v909
    %v911 = vpop.f32.mrf.mxu0
    %v912 = vadd.f32 0.0, %v911
    %913 = vmatmul.bf16.gmra.mxu0 %v797
    %v914 = vpop.f32.mrf.mxu0
    %v915 = vadd.f32 0.0, %v914
    %v916 = vpop.f32.mrf.mxu0
    %v917 = vadd.f32 0.0, %v916
    %918 = vmatmul.bf16.gmra.mxu0 %v798
    %v919 = vpop.f32.mrf.mxu0
    %v920 = vadd.f32 0.0, %v919
    %v921 = vpop.f32.mrf.mxu0
    %v922 = vadd.f32 0.0, %v921
    %923 = vmatmul.bf16.gmra.mxu0 %v799
    %v924 = vpop.f32.mrf.mxu0
    %v925 = vadd.f32 0.0, %v924
    %v926 = vpop.f32.mrf.mxu0
    %v927 = vadd.f32 0.0, %v926
    %928 = vmatmul.bf16.gmra.mxu0 %v800
    %v929 = vpop.f32.mrf.mxu0
    %v930 = vadd.f32 0.0, %v929
    %v931 = vpop.f32.mrf.mxu0
    %v932 = vadd.f32 0.0, %v931
    %933 = vmatmul.bf16.gmra.mxu0 %v801
    %v934 = vpop.f32.mrf.mxu0
    %v935 = vadd.f32 0.0, %v934
    %v936 = vpop.f32.mrf.mxu0
    %v937 = vadd.f32 0.0, %v936
    %938 = vmatmul.bf16.gmra.mxu0 %v802
    %v939 = vpop.f32.mrf.mxu0
    %v940 = vadd.f32 0.0, %v939
    %v941 = vpop.f32.mrf.mxu0
    %v942 = vadd.f32 0.0, %v941
    %943 = vmatmul.bf16.gmra.mxu0 %v803
    %v944 = vpop.f32.mrf.mxu0
    %v945 = vadd.f32 0.0, %v944
    %v946 = vpop.f32.mrf.mxu0
    %v947 = vadd.f32 0.0, %v946
    %948 = vmatmul.bf16.gmra.mxu0 %v804
    %v949 = vpop.f32.mrf.mxu0
    %v950 = vadd.f32 0.0, %v949
    %v951 = vpop.f32.mrf.mxu0
    %v952 = vadd.f32 0.0, %v951
    %953 = vmatmul.bf16.gmra.mxu0 %v805
    %v954 = vpop.f32.mrf.mxu0
    %v955 = vadd.f32 0.0, %v954
    %v956 = vpop.f32.mrf.mxu0
    %v957 = vadd.f32 0.0, %v956
    %958 = vdwg.mxu0
    %v959 = vpack.c.bf16 %v882, %v880
    %v960 = vpack.c.bf16 %v887, %v885
    %v961 = vpack.c.bf16 %v892, %v890
    %v962 = vpack.c.bf16 %v897, %v895
    %v963 = vpack.c.bf16 %v902, %v900
    %v964 = vpack.c.bf16 %v907, %v905
    %v965 = vpack.c.bf16 %v912, %v910
    %v966 = vpack.c.bf16 %v917, %v915
    %v967 = vpack.c.bf16 %v922, %v920
    %v968 = vpack.c.bf16 %v927, %v925
    %v969 = vpack.c.bf16 %v932, %v930
    %v970 = vpack.c.bf16 %v937, %v935
    %v971 = vpack.c.bf16 %v942, %v940
    %v972 = vpack.c.bf16 %v947, %v945
    %v973 = vpack.c.bf16 %v952, %v950
    %v974 = vpack.c.bf16 %v957, %v955
    %v975 = vld [vmem:[%s5] sm:$0x1]
    %v977 = vperm.slane %v975, 0
    %979 = vmatpush.bf16.msra.mxu0 %v966
    %980 = vmatpush.bf16.msra.mxu0 %v965
    %981 = vmatpush.bf16.msra.mxu0 %v964
    %982 = vmatpush.bf16.msra.mxu0 %v963
    %983 = vmatpush.bf16.msra.mxu0 %v962
    %984 = vmatpush.bf16.msra.mxu0 %v961
    %985 = vmatpush.bf16.msra.mxu0 %v960
    %986 = vmatpush.bf16.msra.mxu0 %v959
    %987 = vmatmul.bf16.gmra.mxu0 %v516
    %v988 = vpop.f32.mrf.mxu0
    %v989 = vadd.f32 %v977, %v988
    %v990 = vpop.f32.mrf.mxu0
    %v991 = vadd.f32 %v977, %v990
    %992 = vmatmul.bf16.gmra.mxu0 %v518
    %v993 = vpop.f32.mrf.mxu0
    %v994 = vadd.f32 %v977, %v993
    %v995 = vpop.f32.mrf.mxu0
    %v996 = vadd.f32 %v977, %v995
    %997 = vmatmul.bf16.gmra.mxu0 %v520
    %v998 = vpop.f32.mrf.mxu0
    %v999 = vadd.f32 %v977, %v998
    %v1000 = vpop.f32.mrf.mxu0
    %v1001 = vadd.f32 %v977, %v1000
    %1002 = vmatmul.bf16.gmra.mxu0 %v522
    %v1003 = vpop.f32.mrf.mxu0
    %v1004 = vadd.f32 %v977, %v1003
    %v1005 = vpop.f32.mrf.mxu0
    %v1006 = vadd.f32 %v977, %v1005
    %1007 = vmatmul.bf16.gmra.mxu0 %v524
    %v1008 = vpop.f32.mrf.mxu0
    %v1009 = vadd.f32 %v977, %v1008
    %v1010 = vpop.f32.mrf.mxu0
    %v1011 = vadd.f32 %v977, %v1010
    %1012 = vmatmul.bf16.gmra.mxu0 %v526
    %v1013 = vpop.f32.mrf.mxu0
    %v1014 = vadd.f32 %v977, %v1013
    %v1015 = vpop.f32.mrf.mxu0
    %v1016 = vadd.f32 %v977, %v1015
    %1017 = vmatmul.bf16.gmra.mxu0 %v528
    %v1018 = vpop.f32.mrf.mxu0
    %v1019 = vadd.f32 %v977, %v1018
    %v1020 = vpop.f32.mrf.mxu0
    %v1021 = vadd.f32 %v977, %v1020
    %1022 = vmatmul.bf16.gmra.mxu0 %v530
    %v1023 = vpop.f32.mrf.mxu0
    %v1024 = vadd.f32 %v977, %v1023
    %v1025 = vpop.f32.mrf.mxu0
    %v1026 = vadd.f32 %v977, %v1025
    %1027 = vmatmul.bf16.gmra.mxu0 %v532
    %v1028 = vpop.f32.mrf.mxu0
    %v1029 = vadd.f32 %v977, %v1028
    %v1030 = vpop.f32.mrf.mxu0
    %v1031 = vadd.f32 %v977, %v1030
    %1032 = vmatmul.bf16.gmra.mxu0 %v534
    %v1033 = vpop.f32.mrf.mxu0
    %v1034 = vadd.f32 %v977, %v1033
    %v1035 = vpop.f32.mrf.mxu0
    %v1036 = vadd.f32 %v977, %v1035
    %1037 = vmatmul.bf16.gmra.mxu0 %v536
    %v1038 = vpop.f32.mrf.mxu0
    %v1039 = vadd.f32 %v977, %v1038
    %v1040 = vpop.f32.mrf.mxu0
    %v1041 = vadd.f32 %v977, %v1040
    %1042 = vmatmul.bf16.gmra.mxu0 %v538
    %v1043 = vpop.f32.mrf.mxu0
    %v1044 = vadd.f32 %v977, %v1043
    %v1045 = vpop.f32.mrf.mxu0
    %v1046 = vadd.f32 %v977, %v1045
    %1047 = vmatmul.bf16.gmra.mxu0 %v540
    %v1048 = vpop.f32.mrf.mxu0
    %v1049 = vadd.f32 %v977, %v1048
    %v1050 = vpop.f32.mrf.mxu0
    %v1051 = vadd.f32 %v977, %v1050
    %1052 = vmatmul.bf16.gmra.mxu0 %v542
    %v1053 = vpop.f32.mrf.mxu0
    %v1054 = vadd.f32 %v977, %v1053
    %v1055 = vpop.f32.mrf.mxu0
    %v1056 = vadd.f32 %v977, %v1055
    %1057 = vmatmul.bf16.gmra.mxu0 %v544
    %v1058 = vpop.f32.mrf.mxu0
    %v1059 = vadd.f32 %v977, %v1058
    %v1060 = vpop.f32.mrf.mxu0
    %v1061 = vadd.f32 %v977, %v1060
    %1062 = vmatmul.bf16.gmra.mxu0 %v546
    %v1063 = vpop.f32.mrf.mxu0
    %v1064 = vadd.f32 %v977, %v1063
    %v1065 = vpop.f32.mrf.mxu0
    %v1066 = vadd.f32 %v977, %v1065
    %1067 = vdwg.mxu0
    %1068 = vmatpush.bf16.msra.mxu0 %v974
    %1069 = vmatpush.bf16.msra.mxu0 %v973
    %1070 = vmatpush.bf16.msra.mxu0 %v972
    %1071 = vmatpush.bf16.msra.mxu0 %v971
    %1072 = vmatpush.bf16.msra.mxu0 %v970
    %1073 = vmatpush.bf16.msra.mxu0 %v969
    %1074 = vmatpush.bf16.msra.mxu0 %v968
    %1075 = vmatpush.bf16.msra.mxu0 %v967
    %1076 = vmatmul.bf16.gmra.mxu0 %v517
    %v1077 = vpop.f32.mrf.mxu0
    %v1078 = vadd.f32 %v989, %v1077
    %v1079 = vpop.f32.mrf.mxu0
    %v1080 = vadd.f32 %v991, %v1079
    %1081 = vmatmul.bf16.gmra.mxu0 %v519
    %v1082 = vpop.f32.mrf.mxu0
    %v1083 = vadd.f32 %v994, %v1082
    %v1084 = vpop.f32.mrf.mxu0
    %v1085 = vadd.f32 %v996, %v1084
    %1086 = vmatmul.bf16.gmra.mxu0 %v521
    %v1087 = vpop.f32.mrf.mxu0
    %v1088 = vadd.f32 %v999, %v1087
    %v1089 = vpop.f32.mrf.mxu0
    %v1090 = vadd.f32 %v1001, %v1089
    %1091 = vmatmul.bf16.gmra.mxu0 %v523
    %v1092 = vpop.f32.mrf.mxu0
    %v1093 = vadd.f32 %v1004, %v1092
    %v1094 = vpop.f32.mrf.mxu0
    %v1095 = vadd.f32 %v1006, %v1094
    %1096 = vmatmul.bf16.gmra.mxu0 %v525
    %v1097 = vpop.f32.mrf.mxu0
    %v1098 = vadd.f32 %v1009, %v1097
    %v1099 = vpop.f32.mrf.mxu0
    %v1100 = vadd.f32 %v1011, %v1099
    %1101 = vmatmul.bf16.gmra.mxu0 %v527
    %v1102 = vpop.f32.mrf.mxu0
    %v1103 = vadd.f32 %v1014, %v1102
    %v1104 = vpop.f32.mrf.mxu0
    %v1105 = vadd.f32 %v1016, %v1104
    %1106 = vmatmul.bf16.gmra.mxu0 %v529
    %v1107 = vpop.f32.mrf.mxu0
    %v1108 = vadd.f32 %v1019, %v1107
    %v1109 = vpop.f32.mrf.mxu0
    %v1110 = vadd.f32 %v1021, %v1109
    %1111 = vmatmul.bf16.gmra.mxu0 %v531
    %v1112 = vpop.f32.mrf.mxu0
    %v1113 = vadd.f32 %v1024, %v1112
    %v1114 = vpop.f32.mrf.mxu0
    %v1115 = vadd.f32 %v1026, %v1114
    %1116 = vmatmul.bf16.gmra.mxu0 %v533
    %v1117 = vpop.f32.mrf.mxu0
    %v1118 = vadd.f32 %v1029, %v1117
    %v1119 = vpop.f32.mrf.mxu0
    %v1120 = vadd.f32 %v1031, %v1119
    %1121 = vmatmul.bf16.gmra.mxu0 %v535
    %v1122 = vpop.f32.mrf.mxu0
    %v1123 = vadd.f32 %v1034, %v1122
    %v1124 = vpop.f32.mrf.mxu0
    %v1125 = vadd.f32 %v1036, %v1124
    %1126 = vmatmul.bf16.gmra.mxu0 %v537
    %v1127 = vpop.f32.mrf.mxu0
    %v1128 = vadd.f32 %v1039, %v1127
    %v1129 = vpop.f32.mrf.mxu0
    %v1130 = vadd.f32 %v1041, %v1129
    %1131 = vmatmul.bf16.gmra.mxu0 %v539
    %v1132 = vpop.f32.mrf.mxu0
    %v1133 = vadd.f32 %v1044, %v1132
    %v1134 = vpop.f32.mrf.mxu0
    %v1135 = vadd.f32 %v1046, %v1134
    %1136 = vmatmul.bf16.gmra.mxu0 %v541
    %v1137 = vpop.f32.mrf.mxu0
    %v1138 = vadd.f32 %v1049, %v1137
    %v1139 = vpop.f32.mrf.mxu0
    %v1140 = vadd.f32 %v1051, %v1139
    %1141 = vmatmul.bf16.gmra.mxu0 %v543
    %v1142 = vpop.f32.mrf.mxu0
    %v1143 = vadd.f32 %v1054, %v1142
    %v1144 = vpop.f32.mrf.mxu0
    %v1145 = vadd.f32 %v1056, %v1144
    %1146 = vmatmul.bf16.gmra.mxu0 %v545
    %v1147 = vpop.f32.mrf.mxu0
    %v1148 = vadd.f32 %v1059, %v1147
    %v1149 = vpop.f32.mrf.mxu0
    %v1150 = vadd.f32 %v1061, %v1149
    %1151 = vmatmul.bf16.gmra.mxu0 %v547
    %v1152 = vpop.f32.mrf.mxu0
    %v1153 = vadd.f32 %v1064, %v1152
    %v1154 = vpop.f32.mrf.mxu0
    %v1155 = vadd.f32 %v1066, %v1154
    %1156 = vdwg.mxu0
    %v1157 = vlaneseq
    %v1158 = vand.u32 %v1157, 127
    %vm1159 = vcmp.lt.s32.totalorder %v1158, 6
    %v1160 = vsel %vm1159, %v1078, -1e+30
    %v1161 = vsel %vm1159, %v1080, -1e+30
    %v1162 = vsel %vm1159, %v1083, -1e+30
    %v1163 = vsel %vm1159, %v1085, -1e+30
    %v1164 = vsel %vm1159, %v1088, -1e+30
    %v1165 = vsel %vm1159, %v1090, -1e+30
    %v1166 = vsel %vm1159, %v1093, -1e+30
    %v1167 = vsel %vm1159, %v1095, -1e+30
    %v1168 = vsel %vm1159, %v1098, -1e+30
    %v1169 = vsel %vm1159, %v1100, -1e+30
    %v1170 = vsel %vm1159, %v1103, -1e+30
    %v1171 = vsel %vm1159, %v1105, -1e+30
    %v1172 = vsel %vm1159, %v1108, -1e+30
    %v1173 = vsel %vm1159, %v1110, -1e+30
    %v1174 = vsel %vm1159, %v1113, -1e+30
    %v1175 = vsel %vm1159, %v1115, -1e+30
    %v1176 = vsel %vm1159, %v1118, -1e+30
    %v1177 = vsel %vm1159, %v1120, -1e+30
    %v1178 = vsel %vm1159, %v1123, -1e+30
    %v1179 = vsel %vm1159, %v1125, -1e+30
    %v1180 = vsel %vm1159, %v1128, -1e+30
    %v1181 = vsel %vm1159, %v1130, -1e+30
    %v1182 = vsel %vm1159, %v1133, -1e+30
    %v1183 = vsel %vm1159, %v1135, -1e+30
    %v1184 = vsel %vm1159, %v1138, -1e+30
    %v1185 = vsel %vm1159, %v1140, -1e+30
    %v1186 = vsel %vm1159, %v1143, -1e+30
    %v1187 = vsel %vm1159, %v1145, -1e+30
    %v1188 = vsel %vm1159, %v1148, -1e+30
    %v1189 = vsel %vm1159, %v1150, -1e+30
    %v1190 = vsel %vm1159, %v1153, -1e+30
    %v1191 = vsel %vm1159, %v1155, -1e+30
    %1192 = vmax.xlane.f32.xlu0 %v1160
    %v1193 = vpop.xlane.xlu0 %1192
    %1194 = vmax.xlane.f32.xlu0 %v1161
    %v1195 = vpop.xlane.xlu0 %1194
    %1196 = vmax.xlane.f32.xlu0 %v1162
    %v1197 = vpop.xlane.xlu0 %1196
    %1198 = vmax.xlane.f32.xlu0 %v1163
    %v1199 = vpop.xlane.xlu0 %1198
    %1200 = vmax.xlane.f32.xlu0 %v1164
    %v1201 = vpop.xlane.xlu0 %1200
    %1202 = vmax.xlane.f32.xlu0 %v1165
    %v1203 = vpop.xlane.xlu0 %1202
    %1204 = vmax.xlane.f32.xlu0 %v1166
    %v1205 = vpop.xlane.xlu0 %1204
    %1206 = vmax.xlane.f32.xlu0 %v1167
    %v1207 = vpop.xlane.xlu0 %1206
    %1208 = vmax.xlane.f32.xlu0 %v1168
    %v1209 = vpop.xlane.xlu0 %1208
    %1210 = vmax.xlane.f32.xlu0 %v1169
    %v1211 = vpop.xlane.xlu0 %1210
    %1212 = vmax.xlane.f32.xlu0 %v1170
    %v1213 = vpop.xlane.xlu0 %1212
    %1214 = vmax.xlane.f32.xlu0 %v1171
    %v1215 = vpop.xlane.xlu0 %1214
    %1216 = vmax.xlane.f32.xlu0 %v1172
    %v1217 = vpop.xlane.xlu0 %1216
    %1218 = vmax.xlane.f32.xlu0 %v1173
    %v1219 = vpop.xlane.xlu0 %1218
    %1220 = vmax.xlane.f32.xlu0 %v1174
    %v1221 = vpop.xlane.xlu0 %1220
    %1222 = vmax.xlane.f32.xlu0 %v1175
    %v1223 = vpop.xlane.xlu0 %1222
    %1224 = vmax.xlane.f32.xlu0 %v1176
    %v1225 = vpop.xlane.xlu0 %1224
    %1226 = vmax.xlane.f32.xlu0 %v1177
    %v1227 = vpop.xlane.xlu0 %1226
    %1228 = vmax.xlane.f32.xlu0 %v1178
    %v1229 = vpop.xlane.xlu0 %1228
    %1230 = vmax.xlane.f32.xlu0 %v1179
    %v1231 = vpop.xlane.xlu0 %1230
    %1232 = vmax.xlane.f32.xlu0 %v1180
    %v1233 = vpop.xlane.xlu0 %1232
    %1234 = vmax.xlane.f32.xlu0 %v1181
    %v1235 = vpop.xlane.xlu0 %1234
    %1236 = vmax.xlane.f32.xlu0 %v1182
    %v1237 = vpop.xlane.xlu0 %1236
    %1238 = vmax.xlane.f32.xlu0 %v1183
    %v1239 = vpop.xlane.xlu0 %1238
    %1240 = vmax.xlane.f32.xlu0 %v1184
    %v1241 = vpop.xlane.xlu0 %1240
    %1242 = vmax.xlane.f32.xlu0 %v1185
    %v1243 = vpop.xlane.xlu0 %1242
    %1244 = vmax.xlane.f32.xlu0 %v1186
    %v1245 = vpop.xlane.xlu0 %1244
    %1246 = vmax.xlane.f32.xlu0 %v1187
    %v1247 = vpop.xlane.xlu0 %1246
    %1248 = vmax.xlane.f32.xlu0 %v1188
    %v1249 = vpop.xlane.xlu0 %1248
    %1250 = vmax.xlane.f32.xlu0 %v1189
    %v1251 = vpop.xlane.xlu0 %1250
    %1252 = vmax.xlane.f32.xlu0 %v1190
    %v1253 = vpop.xlane.xlu0 %1252
    %1254 = vmax.xlane.f32.xlu0 %v1191
    %v1255 = vpop.xlane.xlu0 %1254
    %v1256 = vsub.f32 %v1160, %v1193
    %v1257 = vsub.f32 %v1161, %v1195
    %v1258 = vsub.f32 %v1162, %v1197
    %v1259 = vsub.f32 %v1163, %v1199
    %v1260 = vsub.f32 %v1164, %v1201
    %v1261 = vsub.f32 %v1165, %v1203
    %v1262 = vsub.f32 %v1166, %v1205
    %v1263 = vsub.f32 %v1167, %v1207
    %v1264 = vsub.f32 %v1168, %v1209
    %v1265 = vsub.f32 %v1169, %v1211
    %v1266 = vsub.f32 %v1170, %v1213
    %v1267 = vsub.f32 %v1171, %v1215
    %v1268 = vsub.f32 %v1172, %v1217
    %v1269 = vsub.f32 %v1173, %v1219
    %v1270 = vsub.f32 %v1174, %v1221
    %v1271 = vsub.f32 %v1175, %v1223
    %v1272 = vsub.f32 %v1176, %v1225
    %v1273 = vsub.f32 %v1177, %v1227
    %v1274 = vsub.f32 %v1178, %v1229
    %v1275 = vsub.f32 %v1179, %v1231
    %v1276 = vsub.f32 %v1180, %v1233
    %v1277 = vsub.f32 %v1181, %v1235
    %v1278 = vsub.f32 %v1182, %v1237
    %v1279 = vsub.f32 %v1183, %v1239
    %v1280 = vsub.f32 %v1184, %v1241
    %v1281 = vsub.f32 %v1185, %v1243
    %v1282 = vsub.f32 %v1186, %v1245
    %v1283 = vsub.f32 %v1187, %v1247
    %v1284 = vsub.f32 %v1188, %v1249
    %v1285 = vsub.f32 %v1189, %v1251
    %v1286 = vsub.f32 %v1190, %v1253
    %v1287 = vsub.f32 %v1191, %v1255
    %v1288 = vmul.f32 %v1256, 1.442695
    %v1289 = vpow.pop %v1288
    %v1290 = vmul.f32 %v1257, 1.442695
    %v1291 = vpow.pop %v1290
    %v1292 = vmul.f32 %v1258, 1.442695
    %v1293 = vpow.pop %v1292
    %v1294 = vmul.f32 %v1259, 1.442695
    %v1295 = vpow.pop %v1294
    %v1296 = vmul.f32 %v1260, 1.442695
    %v1297 = vpow.pop %v1296
    %v1298 = vmul.f32 %v1261, 1.442695
    %v1299 = vpow.pop %v1298
    %v1300 = vmul.f32 %v1262, 1.442695
    %v1301 = vpow.pop %v1300
    %v1302 = vmul.f32 %v1263, 1.442695
    %v1303 = vpow.pop %v1302
    %v1304 = vmul.f32 %v1264, 1.442695
    %v1305 = vpow.pop %v1304
    %v1306 = vmul.f32 %v1265, 1.442695
    %v1307 = vpow.pop %v1306
    %v1308 = vmul.f32 %v1266, 1.442695
    %v1309 = vpow.pop %v1308
    %v1310 = vmul.f32 %v1267, 1.442695
    %v1311 = vpow.pop %v1310
    %v1312 = vmul.f32 %v1268, 1.442695
    %v1313 = vpow.pop %v1312
    %v1314 = vmul.f32 %v1269, 1.442695
    %v1315 = vpow.pop %v1314
    %v1316 = vmul.f32 %v1270, 1.442695
    %v1317 = vpow.pop %v1316
    %v1318 = vmul.f32 %v1271, 1.442695
    %v1319 = vpow.pop %v1318
    %v1320 = vmul.f32 %v1272, 1.442695
    %v1321 = vpow.pop %v1320
    %v1322 = vmul.f32 %v1273, 1.442695
    %v1323 = vpow.pop %v1322
    %v1324 = vmul.f32 %v1274, 1.442695
    %v1325 = vpow.pop %v1324
    %v1326 = vmul.f32 %v1275, 1.442695
    %v1327 = vpow.pop %v1326
    %v1328 = vmul.f32 %v1276, 1.442695
    %v1329 = vpow.pop %v1328
    %v1330 = vmul.f32 %v1277, 1.442695
    %v1331 = vpow.pop %v1330
    %v1332 = vmul.f32 %v1278, 1.442695
    %v1333 = vpow.pop %v1332
    %v1334 = vmul.f32 %v1279, 1.442695
    %v1335 = vpow.pop %v1334
    %v1336 = vmul.f32 %v1280, 1.442695
    %v1337 = vpow.pop %v1336
    %v1338 = vmul.f32 %v1281, 1.442695
    %v1339 = vpow.pop %v1338
    %v1340 = vmul.f32 %v1282, 1.442695
    %v1341 = vpow.pop %v1340
    %v1342 = vmul.f32 %v1283, 1.442695
    %v1343 = vpow.pop %v1342
    %v1344 = vmul.f32 %v1284, 1.442695
    %v1345 = vpow.pop %v1344
    %v1346 = vmul.f32 %v1285, 1.442695
    %v1347 = vpow.pop %v1346
    %v1348 = vmul.f32 %v1286, 1.442695
    %v1349 = vpow.pop %v1348
    %v1350 = vmul.f32 %v1287, 1.442695
    %v1351 = vpow.pop %v1350
    %1352 = vadd.xlane.f32.xlu0 %v1289
    %v1353 = vpop.xlane.xlu0 %1352
    %1354 = vadd.xlane.f32.xlu0 %v1291
    %v1355 = vpop.xlane.xlu0 %1354
    %1356 = vadd.xlane.f32.xlu0 %v1293
    %v1357 = vpop.xlane.xlu0 %1356
    %1358 = vadd.xlane.f32.xlu0 %v1295
    %v1359 = vpop.xlane.xlu0 %1358
    %1360 = vadd.xlane.f32.xlu0 %v1297
    %v1361 = vpop.xlane.xlu0 %1360
    %1362 = vadd.xlane.f32.xlu0 %v1299
    %v1363 = vpop.xlane.xlu0 %1362
    %1364 = vadd.xlane.f32.xlu0 %v1301
    %v1365 = vpop.xlane.xlu0 %1364
    %1366 = vadd.xlane.f32.xlu0 %v1303
    %v1367 = vpop.xlane.xlu0 %1366
    %1368 = vadd.xlane.f32.xlu0 %v1305
    %v1369 = vpop.xlane.xlu0 %1368
    %1370 = vadd.xlane.f32.xlu0 %v1307
    %v1371 = vpop.xlane.xlu0 %1370
    %1372 = vadd.xlane.f32.xlu0 %v1309
    %v1373 = vpop.xlane.xlu0 %1372
    %1374 = vadd.xlane.f32.xlu0 %v1311
    %v1375 = vpop.xlane.xlu0 %1374
    %1376 = vadd.xlane.f32.xlu0 %v1313
    %v1377 = vpop.xlane.xlu0 %1376
    %1378 = vadd.xlane.f32.xlu0 %v1315
    %v1379 = vpop.xlane.xlu0 %1378
    %1380 = vadd.xlane.f32.xlu0 %v1317
    %v1381 = vpop.xlane.xlu0 %1380
    %1382 = vadd.xlane.f32.xlu0 %v1319
    %v1383 = vpop.xlane.xlu0 %1382
    %1384 = vadd.xlane.f32.xlu0 %v1321
    %v1385 = vpop.xlane.xlu0 %1384
    %1386 = vadd.xlane.f32.xlu0 %v1323
    %v1387 = vpop.xlane.xlu0 %1386
    %1388 = vadd.xlane.f32.xlu0 %v1325
    %v1389 = vpop.xlane.xlu0 %1388
    %1390 = vadd.xlane.f32.xlu0 %v1327
    %v1391 = vpop.xlane.xlu0 %1390
    %1392 = vadd.xlane.f32.xlu0 %v1329
    %v1393 = vpop.xlane.xlu0 %1392
    %1394 = vadd.xlane.f32.xlu0 %v1331
    %v1395 = vpop.xlane.xlu0 %1394
    %1396 = vadd.xlane.f32.xlu0 %v1333
    %v1397 = vpop.xlane.xlu0 %1396
    %1398 = vadd.xlane.f32.xlu0 %v1335
    %v1399 = vpop.xlane.xlu0 %1398
    %1400 = vadd.xlane.f32.xlu0 %v1337
    %v1401 = vpop.xlane.xlu0 %1400
    %1402 = vadd.xlane.f32.xlu0 %v1339
    %v1403 = vpop.xlane.xlu0 %1402
    %1404 = vadd.xlane.f32.xlu0 %v1341
    %v1405 = vpop.xlane.xlu0 %1404
    %1406 = vadd.xlane.f32.xlu0 %v1343
    %v1407 = vpop.xlane.xlu0 %1406
    %1408 = vadd.xlane.f32.xlu0 %v1345
    %v1409 = vpop.xlane.xlu0 %1408
    %1410 = vadd.xlane.f32.xlu0 %v1347
    %v1411 = vpop.xlane.xlu0 %1410
    %1412 = vadd.xlane.f32.xlu0 %v1349
    %v1413 = vpop.xlane.xlu0 %1412
    %1414 = vadd.xlane.f32.xlu0 %v1351
    %v1415 = vpop.xlane.xlu0 %1414
    %v1416 = vlog2.pop %v1353
    %v1417 = vmul.f32 %v1416, 0.6931472
    %v1418 = vlog2.pop %v1355
    %v1419 = vmul.f32 %v1418, 0.6931472
    %v1420 = vlog2.pop %v1357
    %v1421 = vmul.f32 %v1420, 0.6931472
    %v1422 = vlog2.pop %v1359
    %v1423 = vmul.f32 %v1422, 0.6931472
    %v1424 = vlog2.pop %v1361
    %v1425 = vmul.f32 %v1424, 0.6931472
    %v1426 = vlog2.pop %v1363
    %v1427 = vmul.f32 %v1426, 0.6931472
    %v1428 = vlog2.pop %v1365
    %v1429 = vmul.f32 %v1428, 0.6931472
    %v1430 = vlog2.pop %v1367
    %v1431 = vmul.f32 %v1430, 0.6931472
    %v1432 = vlog2.pop %v1369
    %v1433 = vmul.f32 %v1432, 0.6931472
    %v1434 = vlog2.pop %v1371
    %v1435 = vmul.f32 %v1434, 0.6931472
    %v1436 = vlog2.pop %v1373
    %v1437 = vmul.f32 %v1436, 0.6931472
    %v1438 = vlog2.pop %v1375
    %v1439 = vmul.f32 %v1438, 0.6931472
    %v1440 = vlog2.pop %v1377
    %v1441 = vmul.f32 %v1440, 0.6931472
    %v1442 = vlog2.pop %v1379
    %v1443 = vmul.f32 %v1442, 0.6931472
    %v1444 = vlog2.pop %v1381
    %v1445 = vmul.f32 %v1444, 0.6931472
    %v1446 = vlog2.pop %v1383
    %v1447 = vmul.f32 %v1446, 0.6931472
    %v1448 = vlog2.pop %v1385
    %v1449 = vmul.f32 %v1448, 0.6931472
    %v1450 = vlog2.pop %v1387
    %v1451 = vmul.f32 %v1450, 0.6931472
    %v1452 = vlog2.pop %v1389
    %v1453 = vmul.f32 %v1452, 0.6931472
    %v1454 = vlog2.pop %v1391
    %v1455 = vmul.f32 %v1454, 0.6931472
    %v1456 = vlog2.pop %v1393
    %v1457 = vmul.f32 %v1456, 0.6931472
    %v1458 = vlog2.pop %v1395
    %v1459 = vmul.f32 %v1458, 0.6931472
    %v1460 = vlog2.pop %v1397
    %v1461 = vmul.f32 %v1460, 0.6931472
    %v1462 = vlog2.pop %v1399
    %v1463 = vmul.f32 %v1462, 0.6931472
    %v1464 = vlog2.pop %v1401
    %v1465 = vmul.f32 %v1464, 0.6931472
    %v1466 = vlog2.pop %v1403
    %v1467 = vmul.f32 %v1466, 0.6931472
    %v1468 = vlog2.pop %v1405
    %v1469 = vmul.f32 %v1468, 0.6931472
    %v1470 = vlog2.pop %v1407
    %v1471 = vmul.f32 %v1470, 0.6931472
    %v1472 = vlog2.pop %v1409
    %v1473 = vmul.f32 %v1472, 0.6931472
    %v1474 = vlog2.pop %v1411
    %v1475 = vmul.f32 %v1474, 0.6931472
    %v1476 = vlog2.pop %v1413
    %v1477 = vmul.f32 %v1476, 0.6931472
    %v1478 = vlog2.pop %v1415
    %v1479 = vmul.f32 %v1478, 0.6931472
    %v1480 = vsub.f32 %v1256, %v1417
    %v1481 = vsub.f32 %v1257, %v1419
    %v1482 = vsub.f32 %v1258, %v1421
    %v1483 = vsub.f32 %v1259, %v1423
    %v1484 = vsub.f32 %v1260, %v1425
    %v1485 = vsub.f32 %v1261, %v1427
    %v1486 = vsub.f32 %v1262, %v1429
    %v1487 = vsub.f32 %v1263, %v1431
    %v1488 = vsub.f32 %v1264, %v1433
    %v1489 = vsub.f32 %v1265, %v1435
    %v1490 = vsub.f32 %v1266, %v1437
    %v1491 = vsub.f32 %v1267, %v1439
    %v1492 = vsub.f32 %v1268, %v1441
    %v1493 = vsub.f32 %v1269, %v1443
    %v1494 = vsub.f32 %v1270, %v1445
    %v1495 = vsub.f32 %v1271, %v1447
    %v1496 = vsub.f32 %v1272, %v1449
    %v1497 = vsub.f32 %v1273, %v1451
    %v1498 = vsub.f32 %v1274, %v1453
    %v1499 = vsub.f32 %v1275, %v1455
    %v1500 = vsub.f32 %v1276, %v1457
    %v1501 = vsub.f32 %v1277, %v1459
    %v1502 = vsub.f32 %v1278, %v1461
    %v1503 = vsub.f32 %v1279, %v1463
    %v1504 = vsub.f32 %v1280, %v1465
    %v1505 = vsub.f32 %v1281, %v1467
    %v1506 = vsub.f32 %v1282, %v1469
    %v1507 = vsub.f32 %v1283, %v1471
    %v1508 = vsub.f32 %v1284, %v1473
    %v1509 = vsub.f32 %v1285, %v1475
    %v1510 = vsub.f32 %v1286, %v1477
    %v1511 = vsub.f32 %v1287, %v1479
    %1512 = vst [vmem:[#allocation10] sm:$0xff] %v1480
    %1513 = vst [vmem:[#allocation10 + $0x8] sm:$0xff] %v1481
    %1514 = vst [vmem:[#allocation10 + $0x10] sm:$0xff] %v1482
    %1515 = vst [vmem:[#allocation10 + $0x18] sm:$0xff] %v1483
    %1516 = vst [vmem:[#allocation10 + $0x20] sm:$0xff] %v1484
    %1517 = vst [vmem:[#allocation10 + $0x28] sm:$0xff] %v1485
    %1518 = vst [vmem:[#allocation10 + $0x30] sm:$0xff] %v1486
    %1519 = vst [vmem:[#allocation10 + $0x38] sm:$0xff] %v1487
    %1520 = vst [vmem:[#allocation10 + $0x40] sm:$0xff] %v1488
    %1521 = vst [vmem:[#allocation10 + $0x48] sm:$0xff] %v1489
    %1522 = vst [vmem:[#allocation10 + $0x50] sm:$0xff] %v1490
    %1523 = vst [vmem:[#allocation10 + $0x58] sm:$0xff] %v1491
    %1524 = vst [vmem:[#allocation10 + $0x60] sm:$0xff] %v1492
    %1525 = vst [vmem:[#allocation10 + $0x68] sm:$0xff] %v1493
    %1526 = vst [vmem:[#allocation10 + $0x70] sm:$0xff] %v1494
    %1527 = vst [vmem:[#allocation10 + $0x78] sm:$0xff] %v1495
    %1528 = vst [vmem:[#allocation10 + $0x80] sm:$0xff] %v1496
    %1529 = vst [vmem:[#allocation10 + $0x88] sm:$0xff] %v1497
    %1530 = vst [vmem:[#allocation10 + $0x90] sm:$0xff] %v1498
    %1531 = vst [vmem:[#allocation10 + $0x98] sm:$0xff] %v1499
    %1532 = vst [vmem:[#allocation10 + $0xa0] sm:$0xff] %v1500
    %1533 = vst [vmem:[#allocation10 + $0xa8] sm:$0xff] %v1501
    %1534 = vst [vmem:[#allocation10 + $0xb0] sm:$0xff] %v1502
    %1535 = vst [vmem:[#allocation10 + $0xb8] sm:$0xff] %v1503
    %1536 = vst [vmem:[#allocation10 + $0xc0] sm:$0xff] %v1504
    %1537 = vst [vmem:[#allocation10 + $0xc8] sm:$0xff] %v1505
    %1538 = vst [vmem:[#allocation10 + $0xd0] sm:$0xff] %v1506
    %1539 = vst [vmem:[#allocation10 + $0xd8] sm:$0xff] %v1507
    %1540 = vst [vmem:[#allocation10 + $0xe0] sm:$0xff] %v1508
    %1541 = vst [vmem:[#allocation10 + $0xe8] sm:$0xff] %v1509
    %1542 = vst [vmem:[#allocation10 + $0xf0] sm:$0xff] %v1510
    %1543 = vst [vmem:[#allocation10 + $0xf8] sm:$0xff] %v1511
    // Predicated region
    $region42: #{tpu_custom_call.1} parent=1 // pred_check
      _
    $region43: #{tpu_custom_call.1} parent=1 // pred_check_branch
      %1545 = sbr.rel (0) target = $region45
    $region44: #{tpu_custom_call.1} parent=1 // pred_region
      %1547 = vsyncadd [#allocation4], 0
      %s1548 = sshll.u32 [#allocation10], 4
      %s1549 = int_to_ptr.vmem [resolvable:$true] %s1548
      %s1550 = sshll.u32 %s6, 4
      %s1551 = int_to_ptr.hbm [resolvable:$true] %s1550
      %1556 = dma.vmem_to_hbm [thread:$0]  %s1549, 4096, %s1551, [#allocation4], 128, 128, 8
    $region45: #{tpu_custom_call.1} parent=1 // pred_fallthru
      _
    // Predicated region
    $region46: #{tpu_custom_call.1} parent=1 // pred_check
      _
    $region47: #{tpu_custom_call.1} parent=1 // pred_check_branch
      %1558 = sbr.rel (0) target = $region49
    $region48: #{tpu_custom_call.1} parent=1 // pred_region
      %1560 = dma.done [#allocation4], 4096
    $region49: #{tpu_custom_call.1} parent=1 // pred_fallthru
      _
    %1561 = vsyncpa [#allocation3], 1
    %1562 = vsyncpa [#allocation6], 1
    %1563 = vsyncpa [#allocation9], 1
    %1564 = vsyncpa [#allocation4], 1

</llo_original>
